<compile_context>
chip_gen: v7x
topology: tpu7x:2x2x1
jax: 0.10.0
libtpu: 0.0.40
codegen_flags: <defaults>
</compile_context>

<pallas_src>
from functools import partial

import jax
import jax.numpy as jnp
import numpy as np
from jax.experimental import pallas as pl
from jax.experimental.pallas import tpu as pltpu


def _round_up(x, m):
    return (x + m - 1) // m * m


def sample_score_kernel(semb_ref, pemb_ref, oemb_ref,
                        wk_ref, bk_ref, wq_ref, bq_ref, u_ref,
                        dots_ref, weights_ref):
    # Projections on the MXU: bf16 inputs, f32 accumulation, f32 bias add.
    sk = jnp.dot(semb_ref[...], wk_ref[...],
                 preferred_element_type=jnp.float32) + bk_ref[...]
    oq = jnp.dot(oemb_ref[...], wq_ref[...],
                 preferred_element_type=jnp.float32) + bq_ref[...]
    p = pemb_ref[...].astype(jnp.float32)          # upcast before elementwise (v5e-safe)

    # dots = (tokeys(semb) * pemb * toqueries(oemb)).sum(dim=-1)   -> (TM,)
    dots = jnp.sum(sk * p * oq, axis=-1)
    dots2 = dots.reshape(dots_ref.shape)           # lane-dense (TM//128, 128)
    dots_ref[...] = dots2

    # weights = log(u) / dots ; reciprocal on the (otherwise idle) EUP.
    weights_ref[...] = jnp.log(u_ref[...]) * pl.reciprocal(dots2, approx=True)


@jax.jit
def sample_scores(nodes, relations, triples, wk, bk, wq, bq, u):
    """nodes: (N, E), relations: (R, E) f32 tables; triples: (B, M, 3) int32;
    wk/wq: (E, E) nn.Linear weights; bk/bq: (E,); u: (B, M) uniform(0,1).
    Returns (dots, weights), both (B, M) f32."""
    B, M, _ = triples.shape
    E = nodes.shape[1]
    rows = B * M

    # Row-tile size: biggest aligned tile up to 1024 (fits v7x VMEM comfortably:
    # 3 streams x 2 buffers x 1024 x E x 2B is a few MiB for realistic E).
    if rows <= 1024:
        tm = _round_up(rows, 128)
        rows_pad = tm
    else:
        tm = 1024
        rows_pad = _round_up(rows, tm)
    grid = rows_pad // tm
    pad = rows_pad - rows

    # bf16 tables -> gathered embedding streams are bf16 (half the HBM bytes).
    # TODO(synk): fuse the gather into the kernel (scalar-prefetched DMA gather)
    # to avoid materializing the (rows, E) streams in HBM at all.
    nodes_bf = nodes.astype(jnp.bfloat16)
    rels_bf = relations.astype(jnp.bfloat16)
    flat = triples.reshape(rows, 3)
    semb = jnp.pad(nodes_bf[flat[:, 0]], ((0, pad), (0, 0)))   # (rows_pad, E)
    pemb = jnp.pad(rels_bf[flat[:, 1]], ((0, pad), (0, 0)))
    oemb = jnp.pad(nodes_bf[flat[:, 2]], ((0, pad), (0, 0)))

    # Lane-dense layout for u and the score outputs: (rows_pad // 128, 128).
    u_flat = jnp.pad(u.reshape(rows).astype(jnp.float32), (0, pad),
                     constant_values=0.5)
    u2 = u_flat.reshape(rows_pad // 128, 128)

    wk_t = wk.T.astype(jnp.bfloat16)   # nn.Linear computes x @ W.T
    wq_t = wq.T.astype(jnp.bfloat16)
    bk2 = bk.reshape(1, E).astype(jnp.float32)
    bq2 = bq.reshape(1, E).astype(jnp.float32)

    emb_spec = pl.BlockSpec((tm, E), lambda i: (i, 0))
    w_spec = pl.BlockSpec((E, E), lambda i: (0, 0))     # VMEM-resident weights
    b_spec = pl.BlockSpec((1, E), lambda i: (0, 0))
    s_spec = pl.BlockSpec((tm // 128, 128), lambda i: (i, 0))

    dots_p, weights_p = pl.pallas_call(
        sample_score_kernel,
        out_shape=(jax.ShapeDtypeStruct((rows_pad // 128, 128), jnp.float32),
                   jax.ShapeDtypeStruct((rows_pad // 128, 128), jnp.float32)),
        grid=(grid,),
        in_specs=[emb_spec, emb_spec, emb_spec,
                  w_spec, b_spec, w_spec, b_spec, s_spec],
        out_specs=(s_spec, s_spec),
        compiler_params=pltpu.CompilerParams(
            dimension_semantics=("parallel",),
            vmem_limit_bytes=48 * 1024 * 1024),
    )(semb, pemb, oemb, wk_t, bk2, wq_t, bq2, u2)

    dots = dots_p.reshape(rows_pad)[:rows].reshape(B, M)
    weights = weights_p.reshape(rows_pad)[:rows].reshape(B, M)
    return dots, weights


if __name__ == "__main__":
    # Small, deterministic setup consistent with the module.
    B = 2        # batch.size()  (number of instances)
    M = 8        # mx = max number of padded candidate edges per instance
    E = 32       # embedding dim of self.nodes / self.relations
    N = 16       # number of nodes in the data graph
    R = 4        # number of relations
    KSAMPLE = 4  # self.ksample

    key = jax.random.PRNGKey(0)
    k_nodes, k_rels, k_wk, k_bk, k_wq, k_bq, k_idx, k_u = jax.random.split(key, 8)

    # Parameters (deterministic synthetic init; shapes from __init__ args).
    nodes = jax.random.normal(k_nodes, (N, E), dtype=jnp.float32)
    relations = jax.random.normal(k_rels, (R, E), dtype=jnp.float32)
    wk = jax.random.normal(k_wk, (E, E), dtype=jnp.float32) / jnp.sqrt(E)  # tokeys
    bk = jax.random.normal(k_bk, (E,), dtype=jnp.float32) * 0.01
    wq = jax.random.normal(k_wq, (E, E), dtype=jnp.float32) / jnp.sqrt(E)  # toqueries
    bq = jax.random.normal(k_bq, (E,), dtype=jnp.float32) * 0.01

    # Candidate incident edges padded to M per instance: `all` of shape (B, M, 3)
    # (stand-in for the graph-walk output of batch.gen_inc_edges + padding).
    s_idx = jax.random.randint(k_idx, (B, M), 0, N)
    p_idx = jax.random.randint(jax.random.fold_in(k_idx, 1), (B, M), 0, R)
    o_idx = jax.random.randint(jax.random.fold_in(k_idx, 2), (B, M), 0, N)
    all_triples = jnp.stack([s_idx, p_idx, o_idx], axis=-1).astype(jnp.int32)
    lens = jnp.array([M, M - 2], dtype=jnp.int32)   # valid lengths per instance

    # u ~ Uniform(0,1)  (torch.rand equivalent); avoid exact 0 for log.
    u = jax.random.uniform(k_u, (B, M), dtype=jnp.float32, minval=1e-6, maxval=1.0)

    dots, weights = sample_scores(nodes, relations, all_triples, wk, bk, wq, bq, u)
    dots, weights = jax.block_until_ready((dots, weights))

    # Loose f32 reference check (kernel streams bf16 embeddings, so tolerate
    # bf16-level error; validating magnitudes, not bitwise equality).
    semb_f = nodes[all_triples[:, :, 0]]
    pemb_f = relations[all_triples[:, :, 1]]
    oemb_f = nodes[all_triples[:, :, 2]]
    dots_ref = ((semb_f @ wk.T + bk) * pemb_f * (oemb_f @ wq.T + bq)).sum(-1)
    assert dots.shape == (B, M) and weights.shape == (B, M)
    np.testing.assert_allclose(np.asarray(dots), np.asarray(dots_ref),
                               rtol=0.1, atol=0.5)

    # Glue: descending sort + top-ksample selection of valid (unpadded) edges.
    # Padded positions are masked to -inf so NaN/garbage keys can't win the sort.
    # TODO(synk): torch.sort / Batch.add_edges graph bookkeeping has no Pallas
    # equivalent; done here in plain JAX / Python.
    col = jnp.arange(M)[None, :]
    masked_w = jnp.where(col < lens[:, None], weights, -jnp.inf)
    order = jnp.argsort(-masked_w, axis=1)
    sampled = []
    for bi in range(B):
        valid = [int(j) for j in order[bi] if int(j) < int(lens[bi])][:KSAMPLE]
        sampled.append([tuple(int(x) for x in all_triples[bi, j]) for j in valid])

    assert all(len(s) <= KSAMPLE for s in sampled)
    print("KERNEL_OK")
</pallas_src>

<mosaic_0001>
module attributes {stable_mosaic.version = 11 : i64} {
  func.func @sample_score_kernel(%arg0: i32, %arg1: memref<128x32xbf16, #tpu.memory_space<vmem>>, %arg2: memref<128x32xbf16, #tpu.memory_space<vmem>>, %arg3: memref<128x32xbf16, #tpu.memory_space<vmem>>, %arg4: memref<32x32xbf16, #tpu.memory_space<vmem>>, %arg5: memref<1x32xf32, #tpu.memory_space<vmem>>, %arg6: memref<32x32xbf16, #tpu.memory_space<vmem>>, %arg7: memref<1x32xf32, #tpu.memory_space<vmem>>, %arg8: memref<1x128xf32, #tpu.memory_space<vmem>>, %arg9: memref<1x128xf32, #tpu.memory_space<vmem>>, %arg10: memref<1x128xf32, #tpu.memory_space<vmem>>) attributes {dimension_semantics = [#tpu.dimension_semantics<parallel>], iteration_bounds = array<i64: 1>, scalar_prefetch = 0 : i64, scratch_operands = 0 : i64, tpu.core_type = #tpu.core_type<tc>, window_params = [{transform_indices = @transform_0, window_bounds = array<i64: 128, 32>}, {transform_indices = @transform_1, window_bounds = array<i64: 128, 32>}, {transform_indices = @transform_2, window_bounds = array<i64: 128, 32>}, {pipeline_mode = #tpu.pipeline_mode<synchronous>, transform_indices = @transform_3, window_bounds = array<i64: 32, 32>}, {pipeline_mode = #tpu.pipeline_mode<synchronous>, transform_indices = @transform_4, window_bounds = array<i64: 1, 32>}, {pipeline_mode = #tpu.pipeline_mode<synchronous>, transform_indices = @transform_5, window_bounds = array<i64: 32, 32>}, {pipeline_mode = #tpu.pipeline_mode<synchronous>, transform_indices = @transform_6, window_bounds = array<i64: 1, 32>}, {transform_indices = @transform_7, window_bounds = array<i64: 1, 128>}, {transform_indices = @transform_8, window_bounds = array<i64: 1, 128>}, {transform_indices = @transform_9, window_bounds = array<i64: 1, 128>}]} {
    %c0 = arith.constant 0 : index
    %c0_0 = arith.constant 0 : index
    %0 = vector.load %arg1[%c0, %c0_0] : memref<128x32xbf16, #tpu.memory_space<vmem>>, vector<128x32xbf16>
    %c0_1 = arith.constant 0 : index
    %c0_2 = arith.constant 0 : index
    %1 = vector.load %arg4[%c0_1, %c0_2] : memref<32x32xbf16, #tpu.memory_space<vmem>>, vector<32x32xbf16>
    %cst = arith.constant dense<0.000000e+00> : vector<128x32xf32>
    %2 = tpu.matmul %0, %1, %cst {dimension_numbers = #tpu.dot_dimension_numbers<[1], [0], [0], [1], [0, 0, 1, 1], [], []>} : vector<128x32xbf16>, vector<32x32xbf16>, vector<128x32xf32> -> vector<128x32xf32>
    %c0_3 = arith.constant 0 : index
    %c0_4 = arith.constant 0 : index
    %3 = vector.load %arg5[%c0_3, %c0_4] : memref<1x32xf32, #tpu.memory_space<vmem>>, vector<1x32xf32>
    %4 = vector.broadcast %3 : vector<1x32xf32> to vector<128x32xf32>
    %5 = arith.addf %2, %4 : vector<128x32xf32>
    %c0_5 = arith.constant 0 : index
    %c0_6 = arith.constant 0 : index
    %6 = vector.load %arg3[%c0_5, %c0_6] : memref<128x32xbf16, #tpu.memory_space<vmem>>, vector<128x32xbf16>
    %c0_7 = arith.constant 0 : index
    %c0_8 = arith.constant 0 : index
    %7 = vector.load %arg6[%c0_7, %c0_8] : memref<32x32xbf16, #tpu.memory_space<vmem>>, vector<32x32xbf16>
    %cst_9 = arith.constant dense<0.000000e+00> : vector<128x32xf32>
    %8 = tpu.matmul %6, %7, %cst_9 {dimension_numbers = #tpu.dot_dimension_numbers<[1], [0], [0], [1], [0, 0, 1, 1], [], []>} : vector<128x32xbf16>, vector<32x32xbf16>, vector<128x32xf32> -> vector<128x32xf32>
    %c0_10 = arith.constant 0 : index
    %c0_11 = arith.constant 0 : index
    %9 = vector.load %arg7[%c0_10, %c0_11] : memref<1x32xf32, #tpu.memory_space<vmem>>, vector<1x32xf32>
    %10 = vector.broadcast %9 : vector<1x32xf32> to vector<128x32xf32>
    %11 = arith.addf %8, %10 : vector<128x32xf32>
    %c0_12 = arith.constant 0 : index
    %c0_13 = arith.constant 0 : index
    %12 = vector.load %arg2[%c0_12, %c0_13] : memref<128x32xbf16, #tpu.memory_space<vmem>>, vector<128x32xbf16>
    %13 = arith.extf %12 : vector<128x32xbf16> to vector<128x32xf32>
    %14 = arith.mulf %5, %13 : vector<128x32xf32>
    %15 = arith.mulf %14, %11 : vector<128x32xf32>
    %cst_14 = arith.constant dense<0.000000e+00> : vector<128xf32>
    %16 = vector.multi_reduction <add>, %15, %cst_14 [1] : vector<128x32xf32> to vector<128xf32>
    %17 = vector.shape_cast %16 : vector<128xf32> to vector<1x128xf32>
    %c0_15 = arith.constant 0 : index
    %c0_16 = arith.constant 0 : index
    %18 = vector.load %arg9[%c0_15, %c0_16] : memref<1x128xf32, #tpu.memory_space<vmem>>, vector<1x128xf32>
    tpu.vector_store %arg9[%c0_15, %c0_16], %17 {strides = array<i32>} : memref<1x128xf32, #tpu.memory_space<vmem>>, vector<1x128xf32>,
    %c0_17 = arith.constant 0 : index
    %c0_18 = arith.constant 0 : index
    %19 = vector.load %arg8[%c0_17, %c0_18] : memref<1x128xf32, #tpu.memory_space<vmem>>, vector<1x128xf32>
    %20 = math.log %19 : vector<1x128xf32>
    %21 = tpu.reciprocal %17 {approx = true} : vector<1x128xf32> -> vector<1x128xf32>
    %22 = arith.mulf %20, %21 : vector<1x128xf32>
    %c0_19 = arith.constant 0 : index
    %c0_20 = arith.constant 0 : index
    %23 = vector.load %arg10[%c0_19, %c0_20] : memref<1x128xf32, #tpu.memory_space<vmem>>, vector<1x128xf32>
    tpu.vector_store %arg10[%c0_19, %c0_20], %22 {strides = array<i32>} : memref<1x128xf32, #tpu.memory_space<vmem>>, vector<1x128xf32>,
    return
  }
  func.func @transform_0(%arg0: i32) -> (i32, i32) {
    %c0_i32 = arith.constant 0 : i32
    %c0_i32_0 = arith.constant 0 : i32
    return %arg0, %c0_i32 : i32, i32
  }
  func.func @transform_1(%arg0: i32) -> (i32, i32) {
    %c0_i32 = arith.constant 0 : i32
    %c0_i32_0 = arith.constant 0 : i32
    return %arg0, %c0_i32 : i32, i32
  }
  func.func @transform_2(%arg0: i32) -> (i32, i32) {
    %c0_i32 = arith.constant 0 : i32
    %c0_i32_0 = arith.constant 0 : i32
    return %arg0, %c0_i32 : i32, i32
  }
  func.func @transform_3(%arg0: i32) -> (i32, i32) {
    %c0_i32 = arith.constant 0 : i32
    %c0_i32_0 = arith.constant 0 : i32
    %c0_i32_1 = arith.constant 0 : i32
    return %c0_i32, %c0_i32_0 : i32, i32
  }
  func.func @transform_4(%arg0: i32) -> (i32, i32) {
    %c0_i32 = arith.constant 0 : i32
    %c0_i32_0 = arith.constant 0 : i32
    %c0_i32_1 = arith.constant 0 : i32
    return %c0_i32, %c0_i32_0 : i32, i32
  }
  func.func @transform_5(%arg0: i32) -> (i32, i32) {
    %c0_i32 = arith.constant 0 : i32
    %c0_i32_0 = arith.constant 0 : i32
    %c0_i32_1 = arith.constant 0 : i32
    return %c0_i32, %c0_i32_0 : i32, i32
  }
  func.func @transform_6(%arg0: i32) -> (i32, i32) {
    %c0_i32 = arith.constant 0 : i32
    %c0_i32_0 = arith.constant 0 : i32
    %c0_i32_1 = arith.constant 0 : i32
    return %c0_i32, %c0_i32_0 : i32, i32
  }
  func.func @transform_7(%arg0: i32) -> (i32, i32) {
    %c0_i32 = arith.constant 0 : i32
    %c0_i32_0 = arith.constant 0 : i32
    return %arg0, %c0_i32 : i32, i32
  }
  func.func @transform_8(%arg0: i32) -> (i32, i32) {
    %c0_i32 = arith.constant 0 : i32
    %c0_i32_0 = arith.constant 0 : i32
    return %arg0, %c0_i32 : i32, i32
  }
  func.func @transform_9(%arg0: i32) -> (i32, i32) {
    %c0_i32 = arith.constant 0 : i32
    %c0_i32_0 = arith.constant 0 : i32
    return %arg0, %c0_i32 : i32, i32
  }
}

</mosaic_0001>

<llo_original>
// kernel: sample_scores.1
$region0: #{sample_scores.1}
  #allocation0 [shape = 'u32[]', space=smem, size = 0x4, offset = 0x4, fixed_abs, tag = 'smem constant byte address 0x4 - core index']
  #allocation1 [shape = 'u32[144,128]{1,0:T(1,128)}', space=vmem, size = 0x12000, scoped, tag = 'internal scratch']
  %s0 = inlined_call_operand.vmem [shape: bf16[128,32], index: 0, kind: input, shape index: {}]
  %s1 = inlined_call_operand.vmem [shape: bf16[128,32], index: 1, kind: input, shape index: {}]
  %s2 = inlined_call_operand.vmem [shape: bf16[128,32], index: 2, kind: input, shape index: {}]
  %s3 = inlined_call_operand.vmem [shape: bf16[32,32], index: 3, kind: input, shape index: {}]
  %s4 = inlined_call_operand.vmem [shape: f32[1,32], index: 4, kind: input, shape index: {}]
  %s5 = inlined_call_operand.vmem [shape: bf16[32,32], index: 5, kind: input, shape index: {}]
  %s6 = inlined_call_operand.vmem [shape: f32[1,32], index: 6, kind: input, shape index: {}]
  %s7 = inlined_call_operand.vmem [shape: f32[1,128], index: 7, kind: input, shape index: {}]
  %s8 = inlined_call_operand.vmem [shape: f32[1,128], index: 8, kind: output, shape index: {0}]
  %s9 = inlined_call_operand.vmem [shape: f32[1,128], index: 9, kind: output, shape index: {1}]
  %10 = xla_tuple %s8, %s9
  %s11 = sld [smem:[#allocation0]]
  $region50: #{sample_scores.1} parent=0
    _
  %s13 = ssub.s32 1, %s11
  %s14 = scalar_select 0, %s13, %s11
  // Predicated region
  $region2: #{sample_scores.1} parent=0 // pred_check
    _
  $region3: #{sample_scores.1} parent=0 // pred_check_branch
    %16 = sbr.rel (0) target = $region5
  $region4: #{sample_scores.1} parent=0 // pred_region
    _
  $region5: #{sample_scores.1} parent=0 // pred_fallthru
    _
  // Predicated region
  $region6: #{sample_scores.1} parent=0 // pred_check
    _
  $region7: #{sample_scores.1} parent=0 // pred_check_branch
    %18 = sbr.rel (0) target = $region9
  $region8: #{sample_scores.1} parent=0 // pred_region
    _
  $region9: #{sample_scores.1} parent=0 // pred_fallthru
    _
  // Predicated region
  $region10: #{sample_scores.1} parent=0 // pred_check
    _
  $region11: #{sample_scores.1} parent=0 // pred_check_branch
    %20 = sbr.rel (0) target = $region13
  $region12: #{sample_scores.1} parent=0 // pred_region
    _
  $region13: #{sample_scores.1} parent=0 // pred_fallthru
    _
  // Predicated region
  $region14: #{sample_scores.1} parent=0 // pred_check
    _
  $region15: #{sample_scores.1} parent=0 // pred_check_branch
    %22 = sbr.rel (0) target = $region17
  $region16: #{sample_scores.1} parent=0 // pred_region
    _
  $region17: #{sample_scores.1} parent=0 // pred_fallthru
    _
  // Predicated region
  $region18: #{sample_scores.1} parent=0 // pred_check
    _
  $region19: #{sample_scores.1} parent=0 // pred_check_branch
    %24 = sbr.rel (0) target = $region21
  $region20: #{sample_scores.1} parent=0 // pred_region
    _
  $region21: #{sample_scores.1} parent=0 // pred_fallthru
    _
  // Predicated region
  $region22: #{sample_scores.1} parent=0 // pred_check
    _
  $region23: #{sample_scores.1} parent=0 // pred_check_branch
    %26 = sbr.rel (0) target = $region25
  $region24: #{sample_scores.1} parent=0 // pred_region
    _
  $region25: #{sample_scores.1} parent=0 // pred_fallthru
    _
  // Predicated region
  $region26: #{sample_scores.1} parent=0 // pred_check
    _
  $region27: #{sample_scores.1} parent=0 // pred_check_branch
    %28 = sbr.rel (0) target = $region29
  $region28: #{sample_scores.1} parent=0 // pred_region
    _
  $region29: #{sample_scores.1} parent=0 // pred_fallthru
    _
  // Predicated region
  $region30: #{sample_scores.1} parent=0 // pred_check
    _
  $region31: #{sample_scores.1} parent=0 // pred_check_branch
    %30 = sbr.rel (0) target = $region33
  $region32: #{sample_scores.1} parent=0 // pred_region
    _
  $region33: #{sample_scores.1} parent=0 // pred_fallthru
    _
  %v32 = vld [vmem:[%s0] sm:$0xf]
  %v33 = vld [vmem:[%s0 + $0x4] sm:$0xf]
  %v34 = vld [vmem:[%s0 + $0x8] sm:$0xf]
  %v35 = vld [vmem:[%s0 + $0xc] sm:$0xf]
  %v36 = vld [vmem:[%s0 + $0x10] sm:$0xf]
  %v37 = vld [vmem:[%s0 + $0x14] sm:$0xf]
  %v38 = vld [vmem:[%s0 + $0x18] sm:$0xf]
  %v39 = vld [vmem:[%s0 + $0x1c] sm:$0xf]
  %v40 = vld [vmem:[%s0 + $0x20] sm:$0xf]
  %v41 = vld [vmem:[%s0 + $0x24] sm:$0xf]
  %v42 = vld [vmem:[%s0 + $0x28] sm:$0xf]
  %v43 = vld [vmem:[%s0 + $0x2c] sm:$0xf]
  %v44 = vld [vmem:[%s0 + $0x30] sm:$0xf]
  %v45 = vld [vmem:[%s0 + $0x34] sm:$0xf]
  %v46 = vld [vmem:[%s0 + $0x38] sm:$0xf]
  %v47 = vld [vmem:[%s0 + $0x3c] sm:$0xf]
  %v48 = vld [vmem:[%s3] sm:$0xf]
  %v49 = vld [vmem:[%s3 + $0x4] sm:$0xf]
  %v50 = vld [vmem:[%s3 + $0x8] sm:$0xf]
  %v51 = vld [vmem:[%s3 + $0xc] sm:$0xf]
  %v52 = vld [vmem:[%s4] sm:$0x1]
  %v54 = vlaneseq
  %v55 = vshrl.u32 %v54, 7
  %v56 = vsub.s32 0, %v55
  %v57 = vrot.slane %v52, %v56
  %v75 = vunpack.c.l.b16 %v32
  %v76 = vunpack.c.l.b16 %v33
  %v77 = vunpack.c.l.b16 %v34
  %v78 = vunpack.c.l.b16 %v35
  %v79 = vunpack.c.l.b16 %v36
  %v80 = vunpack.c.l.b16 %v37
  %v81 = vunpack.c.l.b16 %v38
  %v82 = vunpack.c.l.b16 %v39
  %v83 = vunpack.c.l.b16 %v40
  %v84 = vunpack.c.l.b16 %v41
  %v85 = vunpack.c.l.b16 %v42
  %v86 = vunpack.c.l.b16 %v43
  %v87 = vunpack.c.l.b16 %v44
  %v88 = vunpack.c.l.b16 %v45
  %v89 = vunpack.c.l.b16 %v46
  %v90 = vunpack.c.l.b16 %v47
  %v91 = vpack.c.b16 %v76, %v75
  %v92 = vpack.c.b16 %v78, %v77
  %v93 = vpack.c.b16 %v80, %v79
  %v94 = vpack.c.b16 %v82, %v81
  %v95 = vpack.c.b16 %v84, %v83
  %v96 = vpack.c.b16 %v86, %v85
  %v97 = vpack.c.b16 %v88, %v87
  %v98 = vpack.c.b16 %v90, %v89
  %v103 = vunpack.c.l.b16 %v48
  %v104 = vunpack.c.l.b16 %v49
  %v105 = vunpack.c.l.b16 %v50
  %v106 = vunpack.c.l.b16 %v51
  %v107 = vpack.c.b16 %v104, %v103
  %v108 = vpack.c.b16 %v106, %v105
  %vm111 = vcmask 261120
  %v113 = vsel %vm111, %v91, 0
  %v116 = vsel %vm111, %v92, 0
  %v119 = vsel %vm111, %v93, 0
  %v122 = vsel %vm111, %v94, 0
  %v125 = vsel %vm111, %v95, 0
  %v128 = vsel %vm111, %v96, 0
  %v131 = vsel %vm111, %v97, 0
  %v134 = vsel %vm111, %v98, 0
  %136 = vmatprep.subr.bf16.mxu0 0
  %137 = vmatpush1.bf16.msra.mxu0 %v107
  %138 = vmatprep.subr.bf16.mxu0 0
  %139 = vmatpush1.bf16.msra.mxu0 %v108
  %140 = vmatprep.subr.bf16.mxu0 0
  %141 = vmatpush1.bf16.msra.mxu0 0
  %142 = vmatprep.subr.bf16.mxu0 0
  %143 = vmatpush1.bf16.msra.mxu0 0
  %144 = vmatprep.subr.bf16.mxu0 0
  %145 = vmatpush1.bf16.msra.mxu0 0
  %146 = vmatprep.subr.bf16.mxu0 0
  %147 = vmatpush1.bf16.msra.mxu0 0
  %148 = vmatprep.subr.bf16.mxu0 0
  %149 = vmatpush1.bf16.msra.mxu0 0
  %150 = vmatprep.subr.bf16.mxu0 0
  %151 = vmatpush1.bf16.msra.mxu0 0
  %152 = vmatprep.subr.bf16.mxu0 0
  %153 = vmatpush1.bf16.msra.mxu0 0
  %154 = vmatprep.subr.bf16.mxu0 0
  %155 = vmatpush1.bf16.msra.mxu0 0
  %156 = vmatprep.subr.bf16.mxu0 0
  %157 = vmatpush1.bf16.msra.mxu0 0
  %158 = vmatprep.subr.bf16.mxu0 0
  %159 = vmatpush1.bf16.msra.mxu0 0
  %160 = vmatprep.subr.bf16.mxu0 0
  %161 = vmatpush1.bf16.msra.mxu0 0
  %162 = vmatprep.subr.bf16.mxu0 0
  %163 = vmatpush1.bf16.msra.mxu0 0
  %164 = vmatprep.subr.bf16.mxu0 0
  %165 = vmatpush1.bf16.msra.mxu0 0
  %166 = vmatprep.subr.bf16.mxu0 0
  %167 = vmatpush1.bf16.msra.mxu0 0
  %168 = vmatprep.mubr.bf16.mxu0 0
  %169 = vmatmul.mubr.bf16.gmra.mrb[0].mxu0 %v113
  %v170 = vpop.f32.mrb[0].mxu0
  %v171 = vadd.f32 %v57, %v170
  %v172 = vpop.f32.mrb[0].mxu0
  %v173 = vpop.f32.mrb[0].mxu0
  %v174 = vadd.f32 %v57, %v173
  %v175 = vpop.f32.mrb[0].mxu0
  %176 = vmatprep.mubr.bf16.mxu0 0
  %177 = vmatmul.mubr.bf16.gmra.mrb[0].mxu0 %v116
  %v178 = vpop.f32.mrb[0].mxu0
  %v179 = vadd.f32 %v57, %v178
  %v180 = vpop.f32.mrb[0].mxu0
  %v181 = vpop.f32.mrb[0].mxu0
  %v182 = vadd.f32 %v57, %v181
  %v183 = vpop.f32.mrb[0].mxu0
  %184 = vmatprep.mubr.bf16.mxu0 0
  %185 = vmatmul.mubr.bf16.gmra.mrb[0].mxu0 %v119
  %v186 = vpop.f32.mrb[0].mxu0
  %v187 = vadd.f32 %v57, %v186
  %v188 = vpop.f32.mrb[0].mxu0
  %v189 = vpop.f32.mrb[0].mxu0
  %v190 = vadd.f32 %v57, %v189
  %v191 = vpop.f32.mrb[0].mxu0
  %192 = vmatprep.mubr.bf16.mxu0 0
  %193 = vmatmul.mubr.bf16.gmra.mrb[0].mxu0 %v122
  %v194 = vpop.f32.mrb[0].mxu0
  %v195 = vadd.f32 %v57, %v194
  %v196 = vpop.f32.mrb[0].mxu0
  %v197 = vpop.f32.mrb[0].mxu0
  %v198 = vadd.f32 %v57, %v197
  %v199 = vpop.f32.mrb[0].mxu0
  %200 = vmatprep.mubr.bf16.mxu0 0
  %201 = vmatmul.mubr.bf16.gmra.mrb[0].mxu0 %v125
  %v202 = vpop.f32.mrb[0].mxu0
  %v203 = vadd.f32 %v57, %v202
  %v204 = vpop.f32.mrb[0].mxu0
  %v205 = vpop.f32.mrb[0].mxu0
  %v206 = vadd.f32 %v57, %v205
  %v207 = vpop.f32.mrb[0].mxu0
  %208 = vmatprep.mubr.bf16.mxu0 0
  %209 = vmatmul.mubr.bf16.gmra.mrb[0].mxu0 %v128
  %v210 = vpop.f32.mrb[0].mxu0
  %v211 = vadd.f32 %v57, %v210
  %v212 = vpop.f32.mrb[0].mxu0
  %v213 = vpop.f32.mrb[0].mxu0
  %v214 = vadd.f32 %v57, %v213
  %v215 = vpop.f32.mrb[0].mxu0
  %216 = vmatprep.mubr.bf16.mxu0 0
  %217 = vmatmul.mubr.bf16.gmra.mrb[0].mxu0 %v131
  %v218 = vpop.f32.mrb[0].mxu0
  %v219 = vadd.f32 %v57, %v218
  %v220 = vpop.f32.mrb[0].mxu0
  %v221 = vpop.f32.mrb[0].mxu0
  %v222 = vadd.f32 %v57, %v221
  %v223 = vpop.f32.mrb[0].mxu0
  %224 = vmatprep.mubr.bf16.mxu0 0
  %225 = vmatmul.mubr.bf16.gmra.mrb[0].mxu0 %v134
  %v226 = vpop.f32.mrb[0].mxu0
  %v227 = vadd.f32 %v57, %v226
  %v228 = vpop.f32.mrb[0].mxu0
  %v229 = vpop.f32.mrb[0].mxu0
  %v230 = vadd.f32 %v57, %v229
  %v231 = vpop.f32.mrb[0].mxu0
  %232 = vdwg.mxu0
  %v233 = vld [vmem:[%s2] sm:$0xf]
  %v234 = vld [vmem:[%s2 + $0x4] sm:$0xf]
  %v235 = vld [vmem:[%s2 + $0x8] sm:$0xf]
  %v236 = vld [vmem:[%s2 + $0xc] sm:$0xf]
  %v237 = vld [vmem:[%s2 + $0x10] sm:$0xf]
  %v238 = vld [vmem:[%s2 + $0x14] sm:$0xf]
  %v239 = vld [vmem:[%s2 + $0x18] sm:$0xf]
  %v240 = vld [vmem:[%s2 + $0x1c] sm:$0xf]
  %v241 = vld [vmem:[%s2 + $0x20] sm:$0xf]
  %v242 = vld [vmem:[%s2 + $0x24] sm:$0xf]
  %v243 = vld [vmem:[%s2 + $0x28] sm:$0xf]
  %v244 = vld [vmem:[%s2 + $0x2c] sm:$0xf]
  %v245 = vld [vmem:[%s2 + $0x30] sm:$0xf]
  %v246 = vld [vmem:[%s2 + $0x34] sm:$0xf]
  %v247 = vld [vmem:[%s2 + $0x38] sm:$0xf]
  %v248 = vld [vmem:[%s2 + $0x3c] sm:$0xf]
  %v249 = vld [vmem:[%s5] sm:$0xf]
  %v250 = vld [vmem:[%s5 + $0x4] sm:$0xf]
  %v251 = vld [vmem:[%s5 + $0x8] sm:$0xf]
  %v252 = vld [vmem:[%s5 + $0xc] sm:$0xf]
  %v253 = vld [vmem:[%s6] sm:$0x1]
  %v255 = vlaneseq
  %v256 = vshrl.u32 %v255, 7
  %v257 = vsub.s32 0, %v256
  %v258 = vrot.slane %v253, %v257
  %v276 = vunpack.c.l.b16 %v233
  %v277 = vunpack.c.l.b16 %v234
  %v278 = vunpack.c.l.b16 %v235
  %v279 = vunpack.c.l.b16 %v236
  %v280 = vunpack.c.l.b16 %v237
  %v281 = vunpack.c.l.b16 %v238
  %v282 = vunpack.c.l.b16 %v239
  %v283 = vunpack.c.l.b16 %v240
  %v284 = vunpack.c.l.b16 %v241
  %v285 = vunpack.c.l.b16 %v242
  %v286 = vunpack.c.l.b16 %v243
  %v287 = vunpack.c.l.b16 %v244
  %v288 = vunpack.c.l.b16 %v245
  %v289 = vunpack.c.l.b16 %v246
  %v290 = vunpack.c.l.b16 %v247
  %v291 = vunpack.c.l.b16 %v248
  %v292 = vpack.c.b16 %v277, %v276
  %v293 = vpack.c.b16 %v279, %v278
  %v294 = vpack.c.b16 %v281, %v280
  %v295 = vpack.c.b16 %v283, %v282
  %v296 = vpack.c.b16 %v285, %v284
  %v297 = vpack.c.b16 %v287, %v286
  %v298 = vpack.c.b16 %v289, %v288
  %v299 = vpack.c.b16 %v291, %v290
  %v304 = vunpack.c.l.b16 %v249
  %v305 = vunpack.c.l.b16 %v250
  %v306 = vunpack.c.l.b16 %v251
  %v307 = vunpack.c.l.b16 %v252
  %v308 = vpack.c.b16 %v305, %v304
  %v309 = vpack.c.b16 %v307, %v306
  %v313 = vsel %vm111, %v292, 0
  %v316 = vsel %vm111, %v293, 0
  %v319 = vsel %vm111, %v294, 0
  %v322 = vsel %vm111, %v295, 0
  %v325 = vsel %vm111, %v296, 0
  %v328 = vsel %vm111, %v297, 0
  %v331 = vsel %vm111, %v298, 0
  %v334 = vsel %vm111, %v299, 0
  %336 = vmatprep.subr.bf16.mxu0 0
  %337 = vmatpush1.bf16.msra.mxu0 %v308
  %338 = vmatprep.subr.bf16.mxu0 0
  %339 = vmatpush1.bf16.msra.mxu0 %v309
  %340 = vmatprep.subr.bf16.mxu0 0
  %341 = vmatpush1.bf16.msra.mxu0 0
  %342 = vmatprep.subr.bf16.mxu0 0
  %343 = vmatpush1.bf16.msra.mxu0 0
  %344 = vmatprep.subr.bf16.mxu0 0
  %345 = vmatpush1.bf16.msra.mxu0 0
  %346 = vmatprep.subr.bf16.mxu0 0
  %347 = vmatpush1.bf16.msra.mxu0 0
  %348 = vmatprep.subr.bf16.mxu0 0
  %349 = vmatpush1.bf16.msra.mxu0 0
  %350 = vmatprep.subr.bf16.mxu0 0
  %351 = vmatpush1.bf16.msra.mxu0 0
  %352 = vmatprep.subr.bf16.mxu0 0
  %353 = vmatpush1.bf16.msra.mxu0 0
  %354 = vmatprep.subr.bf16.mxu0 0
  %355 = vmatpush1.bf16.msra.mxu0 0
  %356 = vmatprep.subr.bf16.mxu0 0
  %357 = vmatpush1.bf16.msra.mxu0 0
  %358 = vmatprep.subr.bf16.mxu0 0
  %359 = vmatpush1.bf16.msra.mxu0 0
  %360 = vmatprep.subr.bf16.mxu0 0
  %361 = vmatpush1.bf16.msra.mxu0 0
  %362 = vmatprep.subr.bf16.mxu0 0
  %363 = vmatpush1.bf16.msra.mxu0 0
  %364 = vmatprep.subr.bf16.mxu0 0
  %365 = vmatpush1.bf16.msra.mxu0 0
  %366 = vmatprep.subr.bf16.mxu0 0
  %367 = vmatpush1.bf16.msra.mxu0 0
  %368 = vmatprep.mubr.bf16.mxu0 0
  %369 = vmatmul.mubr.bf16.gmra.mrb[0].mxu0 %v313
  %v370 = vpop.f32.mrb[0].mxu0
  %v371 = vadd.f32 %v258, %v370
  %v372 = vpop.f32.mrb[0].mxu0
  %v373 = vpop.f32.mrb[0].mxu0
  %v374 = vadd.f32 %v258, %v373
  %v375 = vpop.f32.mrb[0].mxu0
  %376 = vmatprep.mubr.bf16.mxu0 0
  %377 = vmatmul.mubr.bf16.gmra.mrb[0].mxu0 %v316
  %v378 = vpop.f32.mrb[0].mxu0
  %v379 = vadd.f32 %v258, %v378
  %v380 = vpop.f32.mrb[0].mxu0
  %v381 = vpop.f32.mrb[0].mxu0
  %v382 = vadd.f32 %v258, %v381
  %v383 = vpop.f32.mrb[0].mxu0
  %384 = vmatprep.mubr.bf16.mxu0 0
  %385 = vmatmul.mubr.bf16.gmra.mrb[0].mxu0 %v319
  %v386 = vpop.f32.mrb[0].mxu0
  %v387 = vadd.f32 %v258, %v386
  %v388 = vpop.f32.mrb[0].mxu0
  %v389 = vpop.f32.mrb[0].mxu0
  %v390 = vadd.f32 %v258, %v389
  %v391 = vpop.f32.mrb[0].mxu0
  %392 = vmatprep.mubr.bf16.mxu0 0
  %393 = vmatmul.mubr.bf16.gmra.mrb[0].mxu0 %v322
  %v394 = vpop.f32.mrb[0].mxu0
  %v395 = vadd.f32 %v258, %v394
  %v396 = vpop.f32.mrb[0].mxu0
  %v397 = vpop.f32.mrb[0].mxu0
  %v398 = vadd.f32 %v258, %v397
  %v399 = vpop.f32.mrb[0].mxu0
  %400 = vmatprep.mubr.bf16.mxu0 0
  %401 = vmatmul.mubr.bf16.gmra.mrb[0].mxu0 %v325
  %v402 = vpop.f32.mrb[0].mxu0
  %v403 = vadd.f32 %v258, %v402
  %v404 = vpop.f32.mrb[0].mxu0
  %v405 = vpop.f32.mrb[0].mxu0
  %v406 = vadd.f32 %v258, %v405
  %v407 = vpop.f32.mrb[0].mxu0
  %408 = vmatprep.mubr.bf16.mxu0 0
  %409 = vmatmul.mubr.bf16.gmra.mrb[0].mxu0 %v328
  %v410 = vpop.f32.mrb[0].mxu0
  %v411 = vadd.f32 %v258, %v410
  %v412 = vpop.f32.mrb[0].mxu0
  %v413 = vpop.f32.mrb[0].mxu0
  %v414 = vadd.f32 %v258, %v413
  %v415 = vpop.f32.mrb[0].mxu0
  %416 = vmatprep.mubr.bf16.mxu0 0
  %417 = vmatmul.mubr.bf16.gmra.mrb[0].mxu0 %v331
  %v418 = vpop.f32.mrb[0].mxu0
  %v419 = vadd.f32 %v258, %v418
  %v420 = vpop.f32.mrb[0].mxu0
  %v421 = vpop.f32.mrb[0].mxu0
  %v422 = vadd.f32 %v258, %v421
  %v423 = vpop.f32.mrb[0].mxu0
  %424 = vmatprep.mubr.bf16.mxu0 0
  %425 = vmatmul.mubr.bf16.gmra.mrb[0].mxu0 %v334
  %v426 = vpop.f32.mrb[0].mxu0
  %v427 = vadd.f32 %v258, %v426
  %v428 = vpop.f32.mrb[0].mxu0
  %v429 = vpop.f32.mrb[0].mxu0
  %v430 = vadd.f32 %v258, %v429
  %v431 = vpop.f32.mrb[0].mxu0
  %432 = vdwg.mxu0
  %v433 = vld [vmem:[%s1] sm:$0xf]
  %v434 = vld [vmem:[%s1 + $0x4] sm:$0xf]
  %v435 = vld [vmem:[%s1 + $0x8] sm:$0xf]
  %v436 = vld [vmem:[%s1 + $0xc] sm:$0xf]
  %v437 = vld [vmem:[%s1 + $0x10] sm:$0xf]
  %v438 = vld [vmem:[%s1 + $0x14] sm:$0xf]
  %v439 = vld [vmem:[%s1 + $0x18] sm:$0xf]
  %v440 = vld [vmem:[%s1 + $0x1c] sm:$0xf]
  %v441 = vld [vmem:[%s1 + $0x20] sm:$0xf]
  %v442 = vld [vmem:[%s1 + $0x24] sm:$0xf]
  %v443 = vld [vmem:[%s1 + $0x28] sm:$0xf]
  %v444 = vld [vmem:[%s1 + $0x2c] sm:$0xf]
  %v445 = vld [vmem:[%s1 + $0x30] sm:$0xf]
  %v446 = vld [vmem:[%s1 + $0x34] sm:$0xf]
  %v447 = vld [vmem:[%s1 + $0x38] sm:$0xf]
  %v448 = vld [vmem:[%s1 + $0x3c] sm:$0xf]
  %v449 = vunpack.c.l.bf16 %v433
  %v450 = vunpack.c.l.bf16 %v434
  %v451 = vunpack.c.l.bf16 %v435
  %v452 = vunpack.c.l.bf16 %v436
  %v453 = vunpack.c.l.bf16 %v437
  %v454 = vunpack.c.l.bf16 %v438
  %v455 = vunpack.c.l.bf16 %v439
  %v456 = vunpack.c.l.bf16 %v440
  %v457 = vunpack.c.l.bf16 %v441
  %v458 = vunpack.c.l.bf16 %v442
  %v459 = vunpack.c.l.bf16 %v443
  %v460 = vunpack.c.l.bf16 %v444
  %v461 = vunpack.c.l.bf16 %v445
  %v462 = vunpack.c.l.bf16 %v446
  %v463 = vunpack.c.l.bf16 %v447
  %v464 = vunpack.c.l.bf16 %v448
  %v465 = vmul.f32 %v171, %v449
  %v466 = vmul.f32 %v174, %v450
  %v467 = vmul.f32 %v179, %v451
  %v468 = vmul.f32 %v182, %v452
  %v469 = vmul.f32 %v187, %v453
  %v470 = vmul.f32 %v190, %v454
  %v471 = vmul.f32 %v195, %v455
  %v472 = vmul.f32 %v198, %v456
  %v473 = vmul.f32 %v203, %v457
  %v474 = vmul.f32 %v206, %v458
  %v475 = vmul.f32 %v211, %v459
  %v476 = vmul.f32 %v214, %v460
  %v477 = vmul.f32 %v219, %v461
  %v478 = vmul.f32 %v222, %v462
  %v479 = vmul.f32 %v227, %v463
  %v480 = vmul.f32 %v230, %v464
  %v481 = vmul.f32 %v465, %v371
  %v482 = vmul.f32 %v466, %v374
  %v483 = vmul.f32 %v467, %v379
  %v484 = vmul.f32 %v468, %v382
  %v485 = vmul.f32 %v469, %v387
  %v486 = vmul.f32 %v470, %v390
  %v487 = vmul.f32 %v471, %v395
  %v488 = vmul.f32 %v472, %v398
  %v489 = vmul.f32 %v473, %v403
  %v490 = vmul.f32 %v474, %v406
  %v491 = vmul.f32 %v475, %v411
  %v492 = vmul.f32 %v476, %v414
  %v493 = vmul.f32 %v477, %v419
  %v494 = vmul.f32 %v478, %v422
  %v495 = vmul.f32 %v479, %v427
  %v496 = vmul.f32 %v480, %v430
  %v497 = vsel %vm111, %v481, 0.0
  %498 = vadd.xlane.f32.xlu0 %v497
  %v499 = vpop.xlane.xlu0 %498
  %v500 = vsel %vm111, %v482, 0.0
  %501 = vadd.xlane.f32.xlu0 %v500
  %v502 = vpop.xlane.xlu0 %501
  %v503 = vsel %vm111, %v483, 0.0
  %504 = vadd.xlane.f32.xlu0 %v503
  %v505 = vpop.xlane.xlu0 %504
  %v506 = vsel %vm111, %v484, 0.0
  %507 = vadd.xlane.f32.xlu0 %v506
  %v508 = vpop.xlane.xlu0 %507
  %v509 = vsel %vm111, %v485, 0.0
  %510 = vadd.xlane.f32.xlu0 %v509
  %v511 = vpop.xlane.xlu0 %510
  %v512 = vsel %vm111, %v486, 0.0
  %513 = vadd.xlane.f32.xlu0 %v512
  %v514 = vpop.xlane.xlu0 %513
  %v515 = vsel %vm111, %v487, 0.0
  %516 = vadd.xlane.f32.xlu0 %v515
  %v517 = vpop.xlane.xlu0 %516
  %v518 = vsel %vm111, %v488, 0.0
  %519 = vadd.xlane.f32.xlu0 %v518
  %v520 = vpop.xlane.xlu0 %519
  %v521 = vsel %vm111, %v489, 0.0
  %522 = vadd.xlane.f32.xlu0 %v521
  %v523 = vpop.xlane.xlu0 %522
  %v524 = vsel %vm111, %v490, 0.0
  %525 = vadd.xlane.f32.xlu0 %v524
  %v526 = vpop.xlane.xlu0 %525
  %v527 = vsel %vm111, %v491, 0.0
  %528 = vadd.xlane.f32.xlu0 %v527
  %v529 = vpop.xlane.xlu0 %528
  %v530 = vsel %vm111, %v492, 0.0
  %531 = vadd.xlane.f32.xlu0 %v530
  %v532 = vpop.xlane.xlu0 %531
  %v533 = vsel %vm111, %v493, 0.0
  %534 = vadd.xlane.f32.xlu0 %v533
  %v535 = vpop.xlane.xlu0 %534
  %v536 = vsel %vm111, %v494, 0.0
  %537 = vadd.xlane.f32.xlu0 %v536
  %v538 = vpop.xlane.xlu0 %537
  %v539 = vsel %vm111, %v495, 0.0
  %540 = vadd.xlane.f32.xlu0 %v539
  %v541 = vpop.xlane.xlu0 %540
  %v542 = vsel %vm111, %v496, 0.0
  %543 = vadd.xlane.f32.xlu0 %v542
  %v544 = vpop.xlane.xlu0 %543
  %v561 = vlaneseq
  %v562 = vand.u32 %v561, 127
  %v563 = vlaneseq
  %v564 = vshrl.u32 %v563, 7
  %v565 = vsub.s32 %v562, %v564
  %v566 = vrot.slane %v499, %v565
  %v567 = vadd.s32 %v562, 4294967288
  %v568 = vlaneseq
  %v569 = vshrl.u32 %v568, 7
  %v570 = vsub.s32 %v567, %v569
  %v571 = vrot.slane %v502, %v570
  %vm572 = vcmask 130112
  %v573 = vsel %vm572, %v571, %v566
  %v574 = vadd.s32 %v562, 4294967280
  %v575 = vlaneseq
  %v576 = vshrl.u32 %v575, 7
  %v577 = vsub.s32 %v574, %v576
  %v578 = vrot.slane %v505, %v577
  %vm579 = vcmask 195712
  %v580 = vsel %vm579, %v578, %v573
  %v581 = vadd.s32 %v562, 4294967272
  %v582 = vlaneseq
  %v583 = vshrl.u32 %v582, 7
  %v584 = vsub.s32 %v581, %v583
  %v585 = vrot.slane %v508, %v584
  %vm586 = vcmask 261312
  %v587 = vsel %vm586, %v585, %v580
  %v588 = vadd.s32 %v562, 4294967264
  %v589 = vlaneseq
  %v590 = vshrl.u32 %v589, 7
  %v591 = vsub.s32 %v588, %v590
  %v592 = vrot.slane %v511, %v591
  %vm593 = vcmask 326912
  %v594 = vsel %vm593, %v592, %v587
  %v595 = vadd.s32 %v562, 4294967256
  %v596 = vlaneseq
  %v597 = vshrl.u32 %v596, 7
  %v598 = vsub.s32 %v595, %v597
  %v599 = vrot.slane %v514, %v598
  %vm600 = vcmask 392512
  %v601 = vsel %vm600, %v599, %v594
  %v602 = vadd.s32 %v562, 4294967248
  %v603 = vlaneseq
  %v604 = vshrl.u32 %v603, 7
  %v605 = vsub.s32 %v602, %v604
  %v606 = vrot.slane %v517, %v605
  %vm607 = vcmask 458112
  %v608 = vsel %vm607, %v606, %v601
  %v609 = vadd.s32 %v562, 4294967240
  %v610 = vlaneseq
  %v611 = vshrl.u32 %v610, 7
  %v612 = vsub.s32 %v609, %v611
  %v613 = vrot.slane %v520, %v612
  %vm614 = vcmask 523712
  %v615 = vsel %vm614, %v613, %v608
  %v616 = vadd.s32 %v562, 4294967232
  %v617 = vlaneseq
  %v618 = vshrl.u32 %v617, 7
  %v619 = vsub.s32 %v616, %v618
  %v620 = vrot.slane %v523, %v619
  %vm621 = vcmask 589312
  %v622 = vsel %vm621, %v620, %v615
  %v623 = vadd.s32 %v562, 4294967224
  %v624 = vlaneseq
  %v625 = vshrl.u32 %v624, 7
  %v626 = vsub.s32 %v623, %v625
  %v627 = vrot.slane %v526, %v626
  %vm628 = vcmask 654912
  %v629 = vsel %vm628, %v627, %v622
  %v630 = vadd.s32 %v562, 4294967216
  %v631 = vlaneseq
  %v632 = vshrl.u32 %v631, 7
  %v633 = vsub.s32 %v630, %v632
  %v634 = vrot.slane %v529, %v633
  %vm635 = vcmask 720512
  %v636 = vsel %vm635, %v634, %v629
  %v637 = vadd.s32 %v562, 4294967208
  %v638 = vlaneseq
  %v639 = vshrl.u32 %v638, 7
  %v640 = vsub.s32 %v637, %v639
  %v641 = vrot.slane %v532, %v640
  %vm642 = vcmask 786112
  %v643 = vsel %vm642, %v641, %v636
  %v644 = vadd.s32 %v562, 4294967200
  %v645 = vlaneseq
  %v646 = vshrl.u32 %v645, 7
  %v647 = vsub.s32 %v644, %v646
  %v648 = vrot.slane %v535, %v647
  %vm649 = vcmask 851712
  %v650 = vsel %vm649, %v648, %v643
  %v651 = vadd.s32 %v562, 4294967192
  %v652 = vlaneseq
  %v653 = vshrl.u32 %v652, 7
  %v654 = vsub.s32 %v651, %v653
  %v655 = vrot.slane %v538, %v654
  %vm656 = vcmask 917312
  %v657 = vsel %vm656, %v655, %v650
  %v658 = vadd.s32 %v562, 4294967184
  %v659 = vlaneseq
  %v660 = vshrl.u32 %v659, 7
  %v661 = vsub.s32 %v658, %v660
  %v662 = vrot.slane %v541, %v661
  %vm663 = vcmask 982912
  %v664 = vsel %vm663, %v662, %v657
  %v665 = vadd.s32 %v562, 4294967176
  %v666 = vlaneseq
  %v667 = vshrl.u32 %v666, 7
  %v668 = vsub.s32 %v665, %v667
  %v669 = vrot.slane %v544, %v668
  %vm670 = vcmask 1048512
  %v671 = vsel %vm670, %v669, %v664
  %673 = vst [vmem:[%s8] sm:$0x1] %v671
  %v674 = vld [vmem:[%s7] sm:$0x1]
  %v675 = vlog2.pop %v674
  %v676 = vmul.f32 %v675, 0.6931472
  %v677 = vrcp.pop %v499
  %v678 = vrcp.pop %v502
  %v679 = vrcp.pop %v505
  %v680 = vrcp.pop %v508
  %v681 = vrcp.pop %v511
  %v682 = vrcp.pop %v514
  %v683 = vrcp.pop %v517
  %v684 = vrcp.pop %v520
  %v685 = vrcp.pop %v523
  %v686 = vrcp.pop %v526
  %v687 = vrcp.pop %v529
  %v688 = vrcp.pop %v532
  %v689 = vrcp.pop %v535
  %v690 = vrcp.pop %v538
  %v691 = vrcp.pop %v541
  %v692 = vrcp.pop %v544
  %v709 = vlaneseq
  %v710 = vshrl.u32 %v709, 7
  %v711 = vsub.s32 0, %v710
  %v712 = vrot.slane %v677, %v711
  %v713 = vlaneseq
  %v714 = vshrl.u32 %v713, 7
  %v715 = vsub.s32 1, %v714
  %v716 = vrot.slane %v677, %v715
  %v717 = vlaneseq
  %v718 = vshrl.u32 %v717, 7
  %v719 = vsub.s32 2, %v718
  %v720 = vrot.slane %v677, %v719
  %v721 = vlaneseq
  %v722 = vshrl.u32 %v721, 7
  %v723 = vsub.s32 3, %v722
  %v724 = vrot.slane %v677, %v723
  %v725 = vlaneseq
  %v726 = vshrl.u32 %v725, 7
  %v727 = vsub.s32 4, %v726
  %v728 = vrot.slane %v677, %v727
  %v729 = vlaneseq
  %v730 = vshrl.u32 %v729, 7
  %v731 = vsub.s32 5, %v730
  %v732 = vrot.slane %v677, %v731
  %v733 = vlaneseq
  %v734 = vshrl.u32 %v733, 7
  %v735 = vsub.s32 6, %v734
  %v736 = vrot.slane %v677, %v735
  %v737 = vlaneseq
  %v738 = vshrl.u32 %v737, 7
  %v739 = vsub.s32 7, %v738
  %v740 = vrot.slane %v677, %v739
  %v741 = vlaneseq
  %v742 = vshrl.u32 %v741, 7
  %v743 = vsub.s32 0, %v742
  %v744 = vrot.slane %v678, %v743
  %v745 = vlaneseq
  %v746 = vshrl.u32 %v745, 7
  %v747 = vsub.s32 1, %v746
  %v748 = vrot.slane %v678, %v747
  %v749 = vlaneseq
  %v750 = vshrl.u32 %v749, 7
  %v751 = vsub.s32 2, %v750
  %v752 = vrot.slane %v678, %v751
  %v753 = vlaneseq
  %v754 = vshrl.u32 %v753, 7
  %v755 = vsub.s32 3, %v754
  %v756 = vrot.slane %v678, %v755
  %v757 = vlaneseq
  %v758 = vshrl.u32 %v757, 7
  %v759 = vsub.s32 4, %v758
  %v760 = vrot.slane %v678, %v759
  %v761 = vlaneseq
  %v762 = vshrl.u32 %v761, 7
  %v763 = vsub.s32 5, %v762
  %v764 = vrot.slane %v678, %v763
  %v765 = vlaneseq
  %v766 = vshrl.u32 %v765, 7
  %v767 = vsub.s32 6, %v766
  %v768 = vrot.slane %v678, %v767
  %v769 = vlaneseq
  %v770 = vshrl.u32 %v769, 7
  %v771 = vsub.s32 7, %v770
  %v772 = vrot.slane %v678, %v771
  %v773 = vlaneseq
  %v774 = vshrl.u32 %v773, 7
  %v775 = vsub.s32 0, %v774
  %v776 = vrot.slane %v679, %v775
  %v777 = vlaneseq
  %v778 = vshrl.u32 %v777, 7
  %v779 = vsub.s32 1, %v778
  %v780 = vrot.slane %v679, %v779
  %v781 = vlaneseq
  %v782 = vshrl.u32 %v781, 7
  %v783 = vsub.s32 2, %v782
  %v784 = vrot.slane %v679, %v783
  %v785 = vlaneseq
  %v786 = vshrl.u32 %v785, 7
  %v787 = vsub.s32 3, %v786
  %v788 = vrot.slane %v679, %v787
  %v789 = vlaneseq
  %v790 = vshrl.u32 %v789, 7
  %v791 = vsub.s32 4, %v790
  %v792 = vrot.slane %v679, %v791
  %v793 = vlaneseq
  %v794 = vshrl.u32 %v793, 7
  %v795 = vsub.s32 5, %v794
  %v796 = vrot.slane %v679, %v795
  %v797 = vlaneseq
  %v798 = vshrl.u32 %v797, 7
  %v799 = vsub.s32 6, %v798
  %v800 = vrot.slane %v679, %v799
  %v801 = vlaneseq
  %v802 = vshrl.u32 %v801, 7
  %v803 = vsub.s32 7, %v802
  %v804 = vrot.slane %v679, %v803
  %v805 = vlaneseq
  %v806 = vshrl.u32 %v805, 7
  %v807 = vsub.s32 0, %v806
  %v808 = vrot.slane %v680, %v807
  %v809 = vlaneseq
  %v810 = vshrl.u32 %v809, 7
  %v811 = vsub.s32 1, %v810
  %v812 = vrot.slane %v680, %v811
  %v813 = vlaneseq
  %v814 = vshrl.u32 %v813, 7
  %v815 = vsub.s32 2, %v814
  %v816 = vrot.slane %v680, %v815
  %v817 = vlaneseq
  %v818 = vshrl.u32 %v817, 7
  %v819 = vsub.s32 3, %v818
  %v820 = vrot.slane %v680, %v819
  %v821 = vlaneseq
  %v822 = vshrl.u32 %v821, 7
  %v823 = vsub.s32 4, %v822
  %v824 = vrot.slane %v680, %v823
  %v825 = vlaneseq
  %v826 = vshrl.u32 %v825, 7
  %v827 = vsub.s32 5, %v826
  %v828 = vrot.slane %v680, %v827
  %v829 = vlaneseq
  %v830 = vshrl.u32 %v829, 7
  %v831 = vsub.s32 6, %v830
  %v832 = vrot.slane %v680, %v831
  %v833 = vlaneseq
  %v834 = vshrl.u32 %v833, 7
  %v835 = vsub.s32 7, %v834
  %v836 = vrot.slane %v680, %v835
  %v837 = vlaneseq
  %v838 = vshrl.u32 %v837, 7
  %v839 = vsub.s32 0, %v838
  %v840 = vrot.slane %v681, %v839
  %v841 = vlaneseq
  %v842 = vshrl.u32 %v841, 7
  %v843 = vsub.s32 1, %v842
  %v844 = vrot.slane %v681, %v843
  %v845 = vlaneseq
  %v846 = vshrl.u32 %v845, 7
  %v847 = vsub.s32 2, %v846
  %v848 = vrot.slane %v681, %v847
  %v849 = vlaneseq
  %v850 = vshrl.u32 %v849, 7
  %v851 = vsub.s32 3, %v850
  %v852 = vrot.slane %v681, %v851
  %v853 = vlaneseq
  %v854 = vshrl.u32 %v853, 7
  %v855 = vsub.s32 4, %v854
  %v856 = vrot.slane %v681, %v855
  %v857 = vlaneseq
  %v858 = vshrl.u32 %v857, 7
  %v859 = vsub.s32 5, %v858
  %v860 = vrot.slane %v681, %v859
  %v861 = vlaneseq
  %v862 = vshrl.u32 %v861, 7
  %v863 = vsub.s32 6, %v862
  %v864 = vrot.slane %v681, %v863
  %v865 = vlaneseq
  %v866 = vshrl.u32 %v865, 7
  %v867 = vsub.s32 7, %v866
  %v868 = vrot.slane %v681, %v867
  %v869 = vlaneseq
  %v870 = vshrl.u32 %v869, 7
  %v871 = vsub.s32 0, %v870
  %v872 = vrot.slane %v682, %v871
  %v873 = vlaneseq
  %v874 = vshrl.u32 %v873, 7
  %v875 = vsub.s32 1, %v874
  %v876 = vrot.slane %v682, %v875
  %v877 = vlaneseq
  %v878 = vshrl.u32 %v877, 7
  %v879 = vsub.s32 2, %v878
  %v880 = vrot.slane %v682, %v879
  %v881 = vlaneseq
  %v882 = vshrl.u32 %v881, 7
  %v883 = vsub.s32 3, %v882
  %v884 = vrot.slane %v682, %v883
  %v885 = vlaneseq
  %v886 = vshrl.u32 %v885, 7
  %v887 = vsub.s32 4, %v886
  %v888 = vrot.slane %v682, %v887
  %v889 = vlaneseq
  %v890 = vshrl.u32 %v889, 7
  %v891 = vsub.s32 5, %v890
  %v892 = vrot.slane %v682, %v891
  %v893 = vlaneseq
  %v894 = vshrl.u32 %v893, 7
  %v895 = vsub.s32 6, %v894
  %v896 = vrot.slane %v682, %v895
  %v897 = vlaneseq
  %v898 = vshrl.u32 %v897, 7
  %v899 = vsub.s32 7, %v898
  %v900 = vrot.slane %v682, %v899
  %v901 = vlaneseq
  %v902 = vshrl.u32 %v901, 7
  %v903 = vsub.s32 0, %v902
  %v904 = vrot.slane %v683, %v903
  %v905 = vlaneseq
  %v906 = vshrl.u32 %v905, 7
  %v907 = vsub.s32 1, %v906
  %v908 = vrot.slane %v683, %v907
  %v909 = vlaneseq
  %v910 = vshrl.u32 %v909, 7
  %v911 = vsub.s32 2, %v910
  %v912 = vrot.slane %v683, %v911
  %v913 = vlaneseq
  %v914 = vshrl.u32 %v913, 7
  %v915 = vsub.s32 3, %v914
  %v916 = vrot.slane %v683, %v915
  %v917 = vlaneseq
  %v918 = vshrl.u32 %v917, 7
  %v919 = vsub.s32 4, %v918
  %v920 = vrot.slane %v683, %v919
  %v921 = vlaneseq
  %v922 = vshrl.u32 %v921, 7
  %v923 = vsub.s32 5, %v922
  %v924 = vrot.slane %v683, %v923
  %v925 = vlaneseq
  %v926 = vshrl.u32 %v925, 7
  %v927 = vsub.s32 6, %v926
  %v928 = vrot.slane %v683, %v927
  %v929 = vlaneseq
  %v930 = vshrl.u32 %v929, 7
  %v931 = vsub.s32 7, %v930
  %v932 = vrot.slane %v683, %v931
  %v933 = vlaneseq
  %v934 = vshrl.u32 %v933, 7
  %v935 = vsub.s32 0, %v934
  %v936 = vrot.slane %v684, %v935
  %v937 = vlaneseq
  %v938 = vshrl.u32 %v937, 7
  %v939 = vsub.s32 1, %v938
  %v940 = vrot.slane %v684, %v939
  %v941 = vlaneseq
  %v942 = vshrl.u32 %v941, 7
  %v943 = vsub.s32 2, %v942
  %v944 = vrot.slane %v684, %v943
  %v945 = vlaneseq
  %v946 = vshrl.u32 %v945, 7
  %v947 = vsub.s32 3, %v946
  %v948 = vrot.slane %v684, %v947
  %v949 = vlaneseq
  %v950 = vshrl.u32 %v949, 7
  %v951 = vsub.s32 4, %v950
  %v952 = vrot.slane %v684, %v951
  %v953 = vlaneseq
  %v954 = vshrl.u32 %v953, 7
  %v955 = vsub.s32 5, %v954
  %v956 = vrot.slane %v684, %v955
  %v957 = vlaneseq
  %v958 = vshrl.u32 %v957, 7
  %v959 = vsub.s32 6, %v958
  %v960 = vrot.slane %v684, %v959
  %v961 = vlaneseq
  %v962 = vshrl.u32 %v961, 7
  %v963 = vsub.s32 7, %v962
  %v964 = vrot.slane %v684, %v963
  %v965 = vlaneseq
  %v966 = vshrl.u32 %v965, 7
  %v967 = vsub.s32 0, %v966
  %v968 = vrot.slane %v685, %v967
  %v969 = vlaneseq
  %v970 = vshrl.u32 %v969, 7
  %v971 = vsub.s32 1, %v970
  %v972 = vrot.slane %v685, %v971
  %v973 = vlaneseq
  %v974 = vshrl.u32 %v973, 7
  %v975 = vsub.s32 2, %v974
  %v976 = vrot.slane %v685, %v975
  %v977 = vlaneseq
  %v978 = vshrl.u32 %v977, 7
  %v979 = vsub.s32 3, %v978
  %v980 = vrot.slane %v685, %v979
  %v981 = vlaneseq
  %v982 = vshrl.u32 %v981, 7
  %v983 = vsub.s32 4, %v982
  %v984 = vrot.slane %v685, %v983
  %v985 = vlaneseq
  %v986 = vshrl.u32 %v985, 7
  %v987 = vsub.s32 5, %v986
  %v988 = vrot.slane %v685, %v987
  %v989 = vlaneseq
  %v990 = vshrl.u32 %v989, 7
  %v991 = vsub.s32 6, %v990
  %v992 = vrot.slane %v685, %v991
  %v993 = vlaneseq
  %v994 = vshrl.u32 %v993, 7
  %v995 = vsub.s32 7, %v994
  %v996 = vrot.slane %v685, %v995
  %v997 = vlaneseq
  %v998 = vshrl.u32 %v997, 7
  %v999 = vsub.s32 0, %v998
  %v1000 = vrot.slane %v686, %v999
  %v1001 = vlaneseq
  %v1002 = vshrl.u32 %v1001, 7
  %v1003 = vsub.s32 1, %v1002
  %v1004 = vrot.slane %v686, %v1003
  %v1005 = vlaneseq
  %v1006 = vshrl.u32 %v1005, 7
  %v1007 = vsub.s32 2, %v1006
  %v1008 = vrot.slane %v686, %v1007
  %v1009 = vlaneseq
  %v1010 = vshrl.u32 %v1009, 7
  %v1011 = vsub.s32 3, %v1010
  %v1012 = vrot.slane %v686, %v1011
  %v1013 = vlaneseq
  %v1014 = vshrl.u32 %v1013, 7
  %v1015 = vsub.s32 4, %v1014
  %v1016 = vrot.slane %v686, %v1015
  %v1017 = vlaneseq
  %v1018 = vshrl.u32 %v1017, 7
  %v1019 = vsub.s32 5, %v1018
  %v1020 = vrot.slane %v686, %v1019
  %v1021 = vlaneseq
  %v1022 = vshrl.u32 %v1021, 7
  %v1023 = vsub.s32 6, %v1022
  %v1024 = vrot.slane %v686, %v1023
  %v1025 = vlaneseq
  %v1026 = vshrl.u32 %v1025, 7
  %v1027 = vsub.s32 7, %v1026
  %v1028 = vrot.slane %v686, %v1027
  %v1029 = vlaneseq
  %v1030 = vshrl.u32 %v1029, 7
  %v1031 = vsub.s32 0, %v1030
  %v1032 = vrot.slane %v687, %v1031
  %v1033 = vlaneseq
  %v1034 = vshrl.u32 %v1033, 7
  %v1035 = vsub.s32 1, %v1034
  %v1036 = vrot.slane %v687, %v1035
  %v1037 = vlaneseq
  %v1038 = vshrl.u32 %v1037, 7
  %v1039 = vsub.s32 2, %v1038
  %v1040 = vrot.slane %v687, %v1039
  %v1041 = vlaneseq
  %v1042 = vshrl.u32 %v1041, 7
  %v1043 = vsub.s32 3, %v1042
  %v1044 = vrot.slane %v687, %v1043
  %v1045 = vlaneseq
  %v1046 = vshrl.u32 %v1045, 7
  %v1047 = vsub.s32 4, %v1046
  %v1048 = vrot.slane %v687, %v1047
  %v1049 = vlaneseq
  %v1050 = vshrl.u32 %v1049, 7
  %v1051 = vsub.s32 5, %v1050
  %v1052 = vrot.slane %v687, %v1051
  %v1053 = vlaneseq
  %v1054 = vshrl.u32 %v1053, 7
  %v1055 = vsub.s32 6, %v1054
  %v1056 = vrot.slane %v687, %v1055
  %v1057 = vlaneseq
  %v1058 = vshrl.u32 %v1057, 7
  %v1059 = vsub.s32 7, %v1058
  %v1060 = vrot.slane %v687, %v1059
  %v1061 = vlaneseq
  %v1062 = vshrl.u32 %v1061, 7
  %v1063 = vsub.s32 0, %v1062
  %v1064 = vrot.slane %v688, %v1063
  %v1065 = vlaneseq
  %v1066 = vshrl.u32 %v1065, 7
  %v1067 = vsub.s32 1, %v1066
  %v1068 = vrot.slane %v688, %v1067
  %v1069 = vlaneseq
  %v1070 = vshrl.u32 %v1069, 7
  %v1071 = vsub.s32 2, %v1070
  %v1072 = vrot.slane %v688, %v1071
  %v1073 = vlaneseq
  %v1074 = vshrl.u32 %v1073, 7
  %v1075 = vsub.s32 3, %v1074
  %v1076 = vrot.slane %v688, %v1075
  %v1077 = vlaneseq
  %v1078 = vshrl.u32 %v1077, 7
  %v1079 = vsub.s32 4, %v1078
  %v1080 = vrot.slane %v688, %v1079
  %v1081 = vlaneseq
  %v1082 = vshrl.u32 %v1081, 7
  %v1083 = vsub.s32 5, %v1082
  %v1084 = vrot.slane %v688, %v1083
  %v1085 = vlaneseq
  %v1086 = vshrl.u32 %v1085, 7
  %v1087 = vsub.s32 6, %v1086
  %v1088 = vrot.slane %v688, %v1087
  %v1089 = vlaneseq
  %v1090 = vshrl.u32 %v1089, 7
  %v1091 = vsub.s32 7, %v1090
  %v1092 = vrot.slane %v688, %v1091
  %v1093 = vlaneseq
  %v1094 = vshrl.u32 %v1093, 7
  %v1095 = vsub.s32 0, %v1094
  %v1096 = vrot.slane %v689, %v1095
  %v1097 = vlaneseq
  %v1098 = vshrl.u32 %v1097, 7
  %v1099 = vsub.s32 1, %v1098
  %v1100 = vrot.slane %v689, %v1099
  %v1101 = vlaneseq
  %v1102 = vshrl.u32 %v1101, 7
  %v1103 = vsub.s32 2, %v1102
  %v1104 = vrot.slane %v689, %v1103
  %v1105 = vlaneseq
  %v1106 = vshrl.u32 %v1105, 7
  %v1107 = vsub.s32 3, %v1106
  %v1108 = vrot.slane %v689, %v1107
  %v1109 = vlaneseq
  %v1110 = vshrl.u32 %v1109, 7
  %v1111 = vsub.s32 4, %v1110
  %v1112 = vrot.slane %v689, %v1111
  %v1113 = vlaneseq
  %v1114 = vshrl.u32 %v1113, 7
  %v1115 = vsub.s32 5, %v1114
  %v1116 = vrot.slane %v689, %v1115
  %v1117 = vlaneseq
  %v1118 = vshrl.u32 %v1117, 7
  %v1119 = vsub.s32 6, %v1118
  %v1120 = vrot.slane %v689, %v1119
  %v1121 = vlaneseq
  %v1122 = vshrl.u32 %v1121, 7
  %v1123 = vsub.s32 7, %v1122
  %v1124 = vrot.slane %v689, %v1123
  %v1125 = vlaneseq
  %v1126 = vshrl.u32 %v1125, 7
  %v1127 = vsub.s32 0, %v1126
  %v1128 = vrot.slane %v690, %v1127
  %v1129 = vlaneseq
  %v1130 = vshrl.u32 %v1129, 7
  %v1131 = vsub.s32 1, %v1130
  %v1132 = vrot.slane %v690, %v1131
  %v1133 = vlaneseq
  %v1134 = vshrl.u32 %v1133, 7
  %v1135 = vsub.s32 2, %v1134
  %v1136 = vrot.slane %v690, %v1135
  %v1137 = vlaneseq
  %v1138 = vshrl.u32 %v1137, 7
  %v1139 = vsub.s32 3, %v1138
  %v1140 = vrot.slane %v690, %v1139
  %v1141 = vlaneseq
  %v1142 = vshrl.u32 %v1141, 7
  %v1143 = vsub.s32 4, %v1142
  %v1144 = vrot.slane %v690, %v1143
  %v1145 = vlaneseq
  %v1146 = vshrl.u32 %v1145, 7
  %v1147 = vsub.s32 5, %v1146
  %v1148 = vrot.slane %v690, %v1147
  %v1149 = vlaneseq
  %v1150 = vshrl.u32 %v1149, 7
  %v1151 = vsub.s32 6, %v1150
  %v1152 = vrot.slane %v690, %v1151
  %v1153 = vlaneseq
  %v1154 = vshrl.u32 %v1153, 7
  %v1155 = vsub.s32 7, %v1154
  %v1156 = vrot.slane %v690, %v1155
  %v1157 = vlaneseq
  %v1158 = vshrl.u32 %v1157, 7
  %v1159 = vsub.s32 0, %v1158
  %v1160 = vrot.slane %v691, %v1159
  %v1161 = vlaneseq
  %v1162 = vshrl.u32 %v1161, 7
  %v1163 = vsub.s32 1, %v1162
  %v1164 = vrot.slane %v691, %v1163
  %v1165 = vlaneseq
  %v1166 = vshrl.u32 %v1165, 7
  %v1167 = vsub.s32 2, %v1166
  %v1168 = vrot.slane %v691, %v1167
  %v1169 = vlaneseq
  %v1170 = vshrl.u32 %v1169, 7
  %v1171 = vsub.s32 3, %v1170
  %v1172 = vrot.slane %v691, %v1171
  %v1173 = vlaneseq
  %v1174 = vshrl.u32 %v1173, 7
  %v1175 = vsub.s32 4, %v1174
  %v1176 = vrot.slane %v691, %v1175
  %v1177 = vlaneseq
  %v1178 = vshrl.u32 %v1177, 7
  %v1179 = vsub.s32 5, %v1178
  %v1180 = vrot.slane %v691, %v1179
  %v1181 = vlaneseq
  %v1182 = vshrl.u32 %v1181, 7
  %v1183 = vsub.s32 6, %v1182
  %v1184 = vrot.slane %v691, %v1183
  %v1185 = vlaneseq
  %v1186 = vshrl.u32 %v1185, 7
  %v1187 = vsub.s32 7, %v1186
  %v1188 = vrot.slane %v691, %v1187
  %v1189 = vlaneseq
  %v1190 = vshrl.u32 %v1189, 7
  %v1191 = vsub.s32 0, %v1190
  %v1192 = vrot.slane %v692, %v1191
  %v1193 = vlaneseq
  %v1194 = vshrl.u32 %v1193, 7
  %v1195 = vsub.s32 1, %v1194
  %v1196 = vrot.slane %v692, %v1195
  %v1197 = vlaneseq
  %v1198 = vshrl.u32 %v1197, 7
  %v1199 = vsub.s32 2, %v1198
  %v1200 = vrot.slane %v692, %v1199
  %v1201 = vlaneseq
  %v1202 = vshrl.u32 %v1201, 7
  %v1203 = vsub.s32 3, %v1202
  %v1204 = vrot.slane %v692, %v1203
  %v1205 = vlaneseq
  %v1206 = vshrl.u32 %v1205, 7
  %v1207 = vsub.s32 4, %v1206
  %v1208 = vrot.slane %v692, %v1207
  %v1209 = vlaneseq
  %v1210 = vshrl.u32 %v1209, 7
  %v1211 = vsub.s32 5, %v1210
  %v1212 = vrot.slane %v692, %v1211
  %v1213 = vlaneseq
  %v1214 = vshrl.u32 %v1213, 7
  %v1215 = vsub.s32 6, %v1214
  %v1216 = vrot.slane %v692, %v1215
  %v1217 = vlaneseq
  %v1218 = vshrl.u32 %v1217, 7
  %v1219 = vsub.s32 7, %v1218
  %v1220 = vrot.slane %v692, %v1219
  %v1221 = vcombine.low %v712, %v716
  %v1222 = vcombine.low %v720, %v724
  %v1223 = vcombine.low %v728, %v732
  %v1224 = vcombine.low %v736, %v740
  %v1226 = vunpack.c.l.s4 1966171168
  %v1227 = vunpack.c.0.s8 %v1226
  %v1228 = vlaneseq
  %v1229 = vshrl.u32 %v1228, 7
  %v1230 = vsub.s32 %v1227, %v1229
  %v1231 = vrot.slane %v1221, %v1230
  %v1233 = vunpack.c.l.s4 1966171168
  %v1234 = vunpack.c.0.s8 %v1233
  %v1235 = vlaneseq
  %v1236 = vshrl.u32 %v1235, 7
  %v1237 = vsub.s32 %v1234, %v1236
  %v1238 = vrot.slane %v1222, %v1237
  %v1240 = vunpack.c.l.s4 1966171168
  %v1241 = vunpack.c.0.s8 %v1240
  %v1242 = vlaneseq
  %v1243 = vshrl.u32 %v1242, 7
  %v1244 = vsub.s32 %v1241, %v1243
  %v1245 = vrot.slane %v1223, %v1244
  %v1247 = vunpack.c.l.s4 1966171168
  %v1248 = vunpack.c.0.s8 %v1247
  %v1249 = vlaneseq
  %v1250 = vshrl.u32 %v1249, 7
  %v1251 = vsub.s32 %v1248, %v1250
  %v1252 = vrot.slane %v1224, %v1251
  %v1253 = vcombine.low %v1231, %v1238
  %v1254 = vcombine.low %v1245, %v1252
  %v1256 = vunpack.c.l.s4 1966171168
  %v1257 = vunpack.c.0.s8 %v1256
  %v1258 = vlaneseq
  %v1259 = vshrl.u32 %v1258, 7
  %v1260 = vsub.s32 %v1257, %v1259
  %v1261 = vrot.slane %v1253, %v1260
  %v1263 = vunpack.c.l.s4 1966171168
  %v1264 = vunpack.c.0.s8 %v1263
  %v1265 = vlaneseq
  %v1266 = vshrl.u32 %v1265, 7
  %v1267 = vsub.s32 %v1264, %v1266
  %v1268 = vrot.slane %v1254, %v1267
  %v1269 = vcombine.low %v1261, %v1268
  %v1270 = vcombine.low %v744, %v748
  %v1271 = vcombine.low %v752, %v756
  %v1272 = vcombine.low %v760, %v764
  %v1273 = vcombine.low %v768, %v772
  %v1275 = vunpack.c.l.s4 1966171168
  %v1276 = vunpack.c.0.s8 %v1275
  %v1277 = vlaneseq
  %v1278 = vshrl.u32 %v1277, 7
  %v1279 = vsub.s32 %v1276, %v1278
  %v1280 = vrot.slane %v1270, %v1279
  %v1282 = vunpack.c.l.s4 1966171168
  %v1283 = vunpack.c.0.s8 %v1282
  %v1284 = vlaneseq
  %v1285 = vshrl.u32 %v1284, 7
  %v1286 = vsub.s32 %v1283, %v1285
  %v1287 = vrot.slane %v1271, %v1286
  %v1289 = vunpack.c.l.s4 1966171168
  %v1290 = vunpack.c.0.s8 %v1289
  %v1291 = vlaneseq
  %v1292 = vshrl.u32 %v1291, 7
  %v1293 = vsub.s32 %v1290, %v1292
  %v1294 = vrot.slane %v1272, %v1293
  %v1296 = vunpack.c.l.s4 1966171168
  %v1297 = vunpack.c.0.s8 %v1296
  %v1298 = vlaneseq
  %v1299 = vshrl.u32 %v1298, 7
  %v1300 = vsub.s32 %v1297, %v1299
  %v1301 = vrot.slane %v1273, %v1300
  %v1302 = vcombine.low %v1280, %v1287
  %v1303 = vcombine.low %v1294, %v1301
  %v1305 = vunpack.c.l.s4 1966171168
  %v1306 = vunpack.c.0.s8 %v1305
  %v1307 = vlaneseq
  %v1308 = vshrl.u32 %v1307, 7
  %v1309 = vsub.s32 %v1306, %v1308
  %v1310 = vrot.slane %v1302, %v1309
  %v1312 = vunpack.c.l.s4 1966171168
  %v1313 = vunpack.c.0.s8 %v1312
  %v1314 = vlaneseq
  %v1315 = vshrl.u32 %v1314, 7
  %v1316 = vsub.s32 %v1313, %v1315
  %v1317 = vrot.slane %v1303, %v1316
  %v1318 = vcombine.low %v1310, %v1317
  %v1319 = vcombine.low %v776, %v780
  %v1320 = vcombine.low %v784, %v788
  %v1321 = vcombine.low %v792, %v796
  %v1322 = vcombine.low %v800, %v804
  %v1324 = vunpack.c.l.s4 1966171168
  %v1325 = vunpack.c.0.s8 %v1324
  %v1326 = vlaneseq
  %v1327 = vshrl.u32 %v1326, 7
  %v1328 = vsub.s32 %v1325, %v1327
  %v1329 = vrot.slane %v1319, %v1328
  %v1331 = vunpack.c.l.s4 1966171168
  %v1332 = vunpack.c.0.s8 %v1331
  %v1333 = vlaneseq
  %v1334 = vshrl.u32 %v1333, 7
  %v1335 = vsub.s32 %v1332, %v1334
  %v1336 = vrot.slane %v1320, %v1335
  %v1338 = vunpack.c.l.s4 1966171168
  %v1339 = vunpack.c.0.s8 %v1338
  %v1340 = vlaneseq
  %v1341 = vshrl.u32 %v1340, 7
  %v1342 = vsub.s32 %v1339, %v1341
  %v1343 = vrot.slane %v1321, %v1342
  %v1345 = vunpack.c.l.s4 1966171168
  %v1346 = vunpack.c.0.s8 %v1345
  %v1347 = vlaneseq
  %v1348 = vshrl.u32 %v1347, 7
  %v1349 = vsub.s32 %v1346, %v1348
  %v1350 = vrot.slane %v1322, %v1349
  %v1351 = vcombine.low %v1329, %v1336
  %v1352 = vcombine.low %v1343, %v1350
  %v1354 = vunpack.c.l.s4 1966171168
  %v1355 = vunpack.c.0.s8 %v1354
  %v1356 = vlaneseq
  %v1357 = vshrl.u32 %v1356, 7
  %v1358 = vsub.s32 %v1355, %v1357
  %v1359 = vrot.slane %v1351, %v1358
  %v1361 = vunpack.c.l.s4 1966171168
  %v1362 = vunpack.c.0.s8 %v1361
  %v1363 = vlaneseq
  %v1364 = vshrl.u32 %v1363, 7
  %v1365 = vsub.s32 %v1362, %v1364
  %v1366 = vrot.slane %v1352, %v1365
  %v1367 = vcombine.low %v1359, %v1366
  %v1368 = vcombine.low %v808, %v812
  %v1369 = vcombine.low %v816, %v820
  %v1370 = vcombine.low %v824, %v828
  %v1371 = vcombine.low %v832, %v836
  %v1373 = vunpack.c.l.s4 1966171168
  %v1374 = vunpack.c.0.s8 %v1373
  %v1375 = vlaneseq
  %v1376 = vshrl.u32 %v1375, 7
  %v1377 = vsub.s32 %v1374, %v1376
  %v1378 = vrot.slane %v1368, %v1377
  %v1380 = vunpack.c.l.s4 1966171168
  %v1381 = vunpack.c.0.s8 %v1380
  %v1382 = vlaneseq
  %v1383 = vshrl.u32 %v1382, 7
  %v1384 = vsub.s32 %v1381, %v1383
  %v1385 = vrot.slane %v1369, %v1384
  %v1387 = vunpack.c.l.s4 1966171168
  %v1388 = vunpack.c.0.s8 %v1387
  %v1389 = vlaneseq
  %v1390 = vshrl.u32 %v1389, 7
  %v1391 = vsub.s32 %v1388, %v1390
  %v1392 = vrot.slane %v1370, %v1391
  %v1394 = vunpack.c.l.s4 1966171168
  %v1395 = vunpack.c.0.s8 %v1394
  %v1396 = vlaneseq
  %v1397 = vshrl.u32 %v1396, 7
  %v1398 = vsub.s32 %v1395, %v1397
  %v1399 = vrot.slane %v1371, %v1398
  %v1400 = vcombine.low %v1378, %v1385
  %v1401 = vcombine.low %v1392, %v1399
  %v1403 = vunpack.c.l.s4 1966171168
  %v1404 = vunpack.c.0.s8 %v1403
  %v1405 = vlaneseq
  %v1406 = vshrl.u32 %v1405, 7
  %v1407 = vsub.s32 %v1404, %v1406
  %v1408 = vrot.slane %v1400, %v1407
  %v1410 = vunpack.c.l.s4 1966171168
  %v1411 = vunpack.c.0.s8 %v1410
  %v1412 = vlaneseq
  %v1413 = vshrl.u32 %v1412, 7
  %v1414 = vsub.s32 %v1411, %v1413
  %v1415 = vrot.slane %v1401, %v1414
  %v1416 = vcombine.low %v1408, %v1415
  %v1417 = vcombine.low %v840, %v844
  %v1418 = vcombine.low %v848, %v852
  %v1419 = vcombine.low %v856, %v860
  %v1420 = vcombine.low %v864, %v868
  %v1422 = vunpack.c.l.s4 1966171168
  %v1423 = vunpack.c.0.s8 %v1422
  %v1424 = vlaneseq
  %v1425 = vshrl.u32 %v1424, 7
  %v1426 = vsub.s32 %v1423, %v1425
  %v1427 = vrot.slane %v1417, %v1426
  %v1429 = vunpack.c.l.s4 1966171168
  %v1430 = vunpack.c.0.s8 %v1429
  %v1431 = vlaneseq
  %v1432 = vshrl.u32 %v1431, 7
  %v1433 = vsub.s32 %v1430, %v1432
  %v1434 = vrot.slane %v1418, %v1433
  %v1436 = vunpack.c.l.s4 1966171168
  %v1437 = vunpack.c.0.s8 %v1436
  %v1438 = vlaneseq
  %v1439 = vshrl.u32 %v1438, 7
  %v1440 = vsub.s32 %v1437, %v1439
  %v1441 = vrot.slane %v1419, %v1440
  %v1443 = vunpack.c.l.s4 1966171168
  %v1444 = vunpack.c.0.s8 %v1443
  %v1445 = vlaneseq
  %v1446 = vshrl.u32 %v1445, 7
  %v1447 = vsub.s32 %v1444, %v1446
  %v1448 = vrot.slane %v1420, %v1447
  %v1449 = vcombine.low %v1427, %v1434
  %v1450 = vcombine.low %v1441, %v1448
  %v1452 = vunpack.c.l.s4 1966171168
  %v1453 = vunpack.c.0.s8 %v1452
  %v1454 = vlaneseq
  %v1455 = vshrl.u32 %v1454, 7
  %v1456 = vsub.s32 %v1453, %v1455
  %v1457 = vrot.slane %v1449, %v1456
  %v1459 = vunpack.c.l.s4 1966171168
  %v1460 = vunpack.c.0.s8 %v1459
  %v1461 = vlaneseq
  %v1462 = vshrl.u32 %v1461, 7
  %v1463 = vsub.s32 %v1460, %v1462
  %v1464 = vrot.slane %v1450, %v1463
  %v1465 = vcombine.low %v1457, %v1464
  %v1466 = vcombine.low %v872, %v876
  %v1467 = vcombine.low %v880, %v884
  %v1468 = vcombine.low %v888, %v892
  %v1469 = vcombine.low %v896, %v900
  %v1471 = vunpack.c.l.s4 1966171168
  %v1472 = vunpack.c.0.s8 %v1471
  %v1473 = vlaneseq
  %v1474 = vshrl.u32 %v1473, 7
  %v1475 = vsub.s32 %v1472, %v1474
  %v1476 = vrot.slane %v1466, %v1475
  %v1478 = vunpack.c.l.s4 1966171168
  %v1479 = vunpack.c.0.s8 %v1478
  %v1480 = vlaneseq
  %v1481 = vshrl.u32 %v1480, 7
  %v1482 = vsub.s32 %v1479, %v1481
  %v1483 = vrot.slane %v1467, %v1482
  %v1485 = vunpack.c.l.s4 1966171168
  %v1486 = vunpack.c.0.s8 %v1485
  %v1487 = vlaneseq
  %v1488 = vshrl.u32 %v1487, 7
  %v1489 = vsub.s32 %v1486, %v1488
  %v1490 = vrot.slane %v1468, %v1489
  %v1492 = vunpack.c.l.s4 1966171168
  %v1493 = vunpack.c.0.s8 %v1492
  %v1494 = vlaneseq
  %v1495 = vshrl.u32 %v1494, 7
  %v1496 = vsub.s32 %v1493, %v1495
  %v1497 = vrot.slane %v1469, %v1496
  %v1498 = vcombine.low %v1476, %v1483
  %v1499 = vcombine.low %v1490, %v1497
  %v1501 = vunpack.c.l.s4 1966171168
  %v1502 = vunpack.c.0.s8 %v1501
  %v1503 = vlaneseq
  %v1504 = vshrl.u32 %v1503, 7
  %v1505 = vsub.s32 %v1502, %v1504
  %v1506 = vrot.slane %v1498, %v1505
  %v1508 = vunpack.c.l.s4 1966171168
  %v1509 = vunpack.c.0.s8 %v1508
  %v1510 = vlaneseq
  %v1511 = vshrl.u32 %v1510, 7
  %v1512 = vsub.s32 %v1509, %v1511
  %v1513 = vrot.slane %v1499, %v1512
  %v1514 = vcombine.low %v1506, %v1513
  %v1515 = vcombine.low %v904, %v908
  %v1516 = vcombine.low %v912, %v916
  %v1517 = vcombine.low %v920, %v924
  %v1518 = vcombine.low %v928, %v932
  %v1520 = vunpack.c.l.s4 1966171168
  %v1521 = vunpack.c.0.s8 %v1520
  %v1522 = vlaneseq
  %v1523 = vshrl.u32 %v1522, 7
  %v1524 = vsub.s32 %v1521, %v1523
  %v1525 = vrot.slane %v1515, %v1524
  %v1527 = vunpack.c.l.s4 1966171168
  %v1528 = vunpack.c.0.s8 %v1527
  %v1529 = vlaneseq
  %v1530 = vshrl.u32 %v1529, 7
  %v1531 = vsub.s32 %v1528, %v1530
  %v1532 = vrot.slane %v1516, %v1531
  %v1534 = vunpack.c.l.s4 1966171168
  %v1535 = vunpack.c.0.s8 %v1534
  %v1536 = vlaneseq
  %v1537 = vshrl.u32 %v1536, 7
  %v1538 = vsub.s32 %v1535, %v1537
  %v1539 = vrot.slane %v1517, %v1538
  %v1541 = vunpack.c.l.s4 1966171168
  %v1542 = vunpack.c.0.s8 %v1541
  %v1543 = vlaneseq
  %v1544 = vshrl.u32 %v1543, 7
  %v1545 = vsub.s32 %v1542, %v1544
  %v1546 = vrot.slane %v1518, %v1545
  %v1547 = vcombine.low %v1525, %v1532
  %v1548 = vcombine.low %v1539, %v1546
  %v1550 = vunpack.c.l.s4 1966171168
  %v1551 = vunpack.c.0.s8 %v1550
  %v1552 = vlaneseq
  %v1553 = vshrl.u32 %v1552, 7
  %v1554 = vsub.s32 %v1551, %v1553
  %v1555 = vrot.slane %v1547, %v1554
  %v1557 = vunpack.c.l.s4 1966171168
  %v1558 = vunpack.c.0.s8 %v1557
  %v1559 = vlaneseq
  %v1560 = vshrl.u32 %v1559, 7
  %v1561 = vsub.s32 %v1558, %v1560
  %v1562 = vrot.slane %v1548, %v1561
  %v1563 = vcombine.low %v1555, %v1562
  %v1564 = vcombine.low %v936, %v940
  %v1565 = vcombine.low %v944, %v948
  %v1566 = vcombine.low %v952, %v956
  %v1567 = vcombine.low %v960, %v964
  %v1569 = vunpack.c.l.s4 1966171168
  %v1570 = vunpack.c.0.s8 %v1569
  %v1571 = vlaneseq
  %v1572 = vshrl.u32 %v1571, 7
  %v1573 = vsub.s32 %v1570, %v1572
  %v1574 = vrot.slane %v1564, %v1573
  %v1576 = vunpack.c.l.s4 1966171168
  %v1577 = vunpack.c.0.s8 %v1576
  %v1578 = vlaneseq
  %v1579 = vshrl.u32 %v1578, 7
  %v1580 = vsub.s32 %v1577, %v1579
  %v1581 = vrot.slane %v1565, %v1580
  %v1583 = vunpack.c.l.s4 1966171168
  %v1584 = vunpack.c.0.s8 %v1583
  %v1585 = vlaneseq
  %v1586 = vshrl.u32 %v1585, 7
  %v1587 = vsub.s32 %v1584, %v1586
  %v1588 = vrot.slane %v1566, %v1587
  %v1590 = vunpack.c.l.s4 1966171168
  %v1591 = vunpack.c.0.s8 %v1590
  %v1592 = vlaneseq
  %v1593 = vshrl.u32 %v1592, 7
  %v1594 = vsub.s32 %v1591, %v1593
  %v1595 = vrot.slane %v1567, %v1594
  %v1596 = vcombine.low %v1574, %v1581
  %v1597 = vcombine.low %v1588, %v1595
  %v1599 = vunpack.c.l.s4 1966171168
  %v1600 = vunpack.c.0.s8 %v1599
  %v1601 = vlaneseq
  %v1602 = vshrl.u32 %v1601, 7
  %v1603 = vsub.s32 %v1600, %v1602
  %v1604 = vrot.slane %v1596, %v1603
  %v1606 = vunpack.c.l.s4 1966171168
  %v1607 = vunpack.c.0.s8 %v1606
  %v1608 = vlaneseq
  %v1609 = vshrl.u32 %v1608, 7
  %v1610 = vsub.s32 %v1607, %v1609
  %v1611 = vrot.slane %v1597, %v1610
  %v1612 = vcombine.low %v1604, %v1611
  %v1613 = vcombine.low %v968, %v972
  %v1614 = vcombine.low %v976, %v980
  %v1615 = vcombine.low %v984, %v988
  %v1616 = vcombine.low %v992, %v996
  %v1618 = vunpack.c.l.s4 1966171168
  %v1619 = vunpack.c.0.s8 %v1618
  %v1620 = vlaneseq
  %v1621 = vshrl.u32 %v1620, 7
  %v1622 = vsub.s32 %v1619, %v1621
  %v1623 = vrot.slane %v1613, %v1622
  %v1625 = vunpack.c.l.s4 1966171168
  %v1626 = vunpack.c.0.s8 %v1625
  %v1627 = vlaneseq
  %v1628 = vshrl.u32 %v1627, 7
  %v1629 = vsub.s32 %v1626, %v1628
  %v1630 = vrot.slane %v1614, %v1629
  %v1632 = vunpack.c.l.s4 1966171168
  %v1633 = vunpack.c.0.s8 %v1632
  %v1634 = vlaneseq
  %v1635 = vshrl.u32 %v1634, 7
  %v1636 = vsub.s32 %v1633, %v1635
  %v1637 = vrot.slane %v1615, %v1636
  %v1639 = vunpack.c.l.s4 1966171168
  %v1640 = vunpack.c.0.s8 %v1639
  %v1641 = vlaneseq
  %v1642 = vshrl.u32 %v1641, 7
  %v1643 = vsub.s32 %v1640, %v1642
  %v1644 = vrot.slane %v1616, %v1643
  %v1645 = vcombine.low %v1623, %v1630
  %v1646 = vcombine.low %v1637, %v1644
  %v1648 = vunpack.c.l.s4 1966171168
  %v1649 = vunpack.c.0.s8 %v1648
  %v1650 = vlaneseq
  %v1651 = vshrl.u32 %v1650, 7
  %v1652 = vsub.s32 %v1649, %v1651
  %v1653 = vrot.slane %v1645, %v1652
  %v1655 = vunpack.c.l.s4 1966171168
  %v1656 = vunpack.c.0.s8 %v1655
  %v1657 = vlaneseq
  %v1658 = vshrl.u32 %v1657, 7
  %v1659 = vsub.s32 %v1656, %v1658
  %v1660 = vrot.slane %v1646, %v1659
  %v1661 = vcombine.low %v1653, %v1660
  %v1662 = vcombine.low %v1000, %v1004
  %v1663 = vcombine.low %v1008, %v1012
  %v1664 = vcombine.low %v1016, %v1020
  %v1665 = vcombine.low %v1024, %v1028
  %v1667 = vunpack.c.l.s4 1966171168
  %v1668 = vunpack.c.0.s8 %v1667
  %v1669 = vlaneseq
  %v1670 = vshrl.u32 %v1669, 7
  %v1671 = vsub.s32 %v1668, %v1670
  %v1672 = vrot.slane %v1662, %v1671
  %v1674 = vunpack.c.l.s4 1966171168
  %v1675 = vunpack.c.0.s8 %v1674
  %v1676 = vlaneseq
  %v1677 = vshrl.u32 %v1676, 7
  %v1678 = vsub.s32 %v1675, %v1677
  %v1679 = vrot.slane %v1663, %v1678
  %v1681 = vunpack.c.l.s4 1966171168
  %v1682 = vunpack.c.0.s8 %v1681
  %v1683 = vlaneseq
  %v1684 = vshrl.u32 %v1683, 7
  %v1685 = vsub.s32 %v1682, %v1684
  %v1686 = vrot.slane %v1664, %v1685
  %v1688 = vunpack.c.l.s4 1966171168
  %v1689 = vunpack.c.0.s8 %v1688
  %v1690 = vlaneseq
  %v1691 = vshrl.u32 %v1690, 7
  %v1692 = vsub.s32 %v1689, %v1691
  %v1693 = vrot.slane %v1665, %v1692
  %v1694 = vcombine.low %v1672, %v1679
  %v1695 = vcombine.low %v1686, %v1693
  %v1697 = vunpack.c.l.s4 1966171168
  %v1698 = vunpack.c.0.s8 %v1697
  %v1699 = vlaneseq
  %v1700 = vshrl.u32 %v1699, 7
  %v1701 = vsub.s32 %v1698, %v1700
  %v1702 = vrot.slane %v1694, %v1701
  %v1704 = vunpack.c.l.s4 1966171168
  %v1705 = vunpack.c.0.s8 %v1704
  %v1706 = vlaneseq
  %v1707 = vshrl.u32 %v1706, 7
  %v1708 = vsub.s32 %v1705, %v1707
  %v1709 = vrot.slane %v1695, %v1708
  %v1710 = vcombine.low %v1702, %v1709
  %v1711 = vcombine.low %v1032, %v1036
  %v1712 = vcombine.low %v1040, %v1044
  %v1713 = vcombine.low %v1048, %v1052
  %v1714 = vcombine.low %v1056, %v1060
  %v1716 = vunpack.c.l.s4 1966171168
  %v1717 = vunpack.c.0.s8 %v1716
  %v1718 = vlaneseq
  %v1719 = vshrl.u32 %v1718, 7
  %v1720 = vsub.s32 %v1717, %v1719
  %v1721 = vrot.slane %v1711, %v1720
  %v1723 = vunpack.c.l.s4 1966171168
  %v1724 = vunpack.c.0.s8 %v1723
  %v1725 = vlaneseq
  %v1726 = vshrl.u32 %v1725, 7
  %v1727 = vsub.s32 %v1724, %v1726
  %v1728 = vrot.slane %v1712, %v1727
  %v1730 = vunpack.c.l.s4 1966171168
  %v1731 = vunpack.c.0.s8 %v1730
  %v1732 = vlaneseq
  %v1733 = vshrl.u32 %v1732, 7
  %v1734 = vsub.s32 %v1731, %v1733
  %v1735 = vrot.slane %v1713, %v1734
  %v1737 = vunpack.c.l.s4 1966171168
  %v1738 = vunpack.c.0.s8 %v1737
  %v1739 = vlaneseq
  %v1740 = vshrl.u32 %v1739, 7
  %v1741 = vsub.s32 %v1738, %v1740
  %v1742 = vrot.slane %v1714, %v1741
  %v1743 = vcombine.low %v1721, %v1728
  %v1744 = vcombine.low %v1735, %v1742
  %v1746 = vunpack.c.l.s4 1966171168
  %v1747 = vunpack.c.0.s8 %v1746
  %v1748 = vlaneseq
  %v1749 = vshrl.u32 %v1748, 7
  %v1750 = vsub.s32 %v1747, %v1749
  %v1751 = vrot.slane %v1743, %v1750
  %v1753 = vunpack.c.l.s4 1966171168
  %v1754 = vunpack.c.0.s8 %v1753
  %v1755 = vlaneseq
  %v1756 = vshrl.u32 %v1755, 7
  %v1757 = vsub.s32 %v1754, %v1756
  %v1758 = vrot.slane %v1744, %v1757
  %v1759 = vcombine.low %v1751, %v1758
  %v1760 = vcombine.low %v1064, %v1068
  %v1761 = vcombine.low %v1072, %v1076
  %v1762 = vcombine.low %v1080, %v1084
  %v1763 = vcombine.low %v1088, %v1092
  %v1765 = vunpack.c.l.s4 1966171168
  %v1766 = vunpack.c.0.s8 %v1765
  %v1767 = vlaneseq
  %v1768 = vshrl.u32 %v1767, 7
  %v1769 = vsub.s32 %v1766, %v1768
  %v1770 = vrot.slane %v1760, %v1769
  %v1772 = vunpack.c.l.s4 1966171168
  %v1773 = vunpack.c.0.s8 %v1772
  %v1774 = vlaneseq
  %v1775 = vshrl.u32 %v1774, 7
  %v1776 = vsub.s32 %v1773, %v1775
  %v1777 = vrot.slane %v1761, %v1776
  %v1779 = vunpack.c.l.s4 1966171168
  %v1780 = vunpack.c.0.s8 %v1779
  %v1781 = vlaneseq
  %v1782 = vshrl.u32 %v1781, 7
  %v1783 = vsub.s32 %v1780, %v1782
  %v1784 = vrot.slane %v1762, %v1783
  %v1786 = vunpack.c.l.s4 1966171168
  %v1787 = vunpack.c.0.s8 %v1786
  %v1788 = vlaneseq
  %v1789 = vshrl.u32 %v1788, 7
  %v1790 = vsub.s32 %v1787, %v1789
  %v1791 = vrot.slane %v1763, %v1790
  %v1792 = vcombine.low %v1770, %v1777
  %v1793 = vcombine.low %v1784, %v1791
  %v1795 = vunpack.c.l.s4 1966171168
  %v1796 = vunpack.c.0.s8 %v1795
  %v1797 = vlaneseq
  %v1798 = vshrl.u32 %v1797, 7
  %v1799 = vsub.s32 %v1796, %v1798
  %v1800 = vrot.slane %v1792, %v1799
  %v1802 = vunpack.c.l.s4 1966171168
  %v1803 = vunpack.c.0.s8 %v1802
  %v1804 = vlaneseq
  %v1805 = vshrl.u32 %v1804, 7
  %v1806 = vsub.s32 %v1803, %v1805
  %v1807 = vrot.slane %v1793, %v1806
  %v1808 = vcombine.low %v1800, %v1807
  %v1809 = vcombine.low %v1096, %v1100
  %v1810 = vcombine.low %v1104, %v1108
  %v1811 = vcombine.low %v1112, %v1116
  %v1812 = vcombine.low %v1120, %v1124
  %v1814 = vunpack.c.l.s4 1966171168
  %v1815 = vunpack.c.0.s8 %v1814
  %v1816 = vlaneseq
  %v1817 = vshrl.u32 %v1816, 7
  %v1818 = vsub.s32 %v1815, %v1817
  %v1819 = vrot.slane %v1809, %v1818
  %v1821 = vunpack.c.l.s4 1966171168
  %v1822 = vunpack.c.0.s8 %v1821
  %v1823 = vlaneseq
  %v1824 = vshrl.u32 %v1823, 7
  %v1825 = vsub.s32 %v1822, %v1824
  %v1826 = vrot.slane %v1810, %v1825
  %v1828 = vunpack.c.l.s4 1966171168
  %v1829 = vunpack.c.0.s8 %v1828
  %v1830 = vlaneseq
  %v1831 = vshrl.u32 %v1830, 7
  %v1832 = vsub.s32 %v1829, %v1831
  %v1833 = vrot.slane %v1811, %v1832
  %v1835 = vunpack.c.l.s4 1966171168
  %v1836 = vunpack.c.0.s8 %v1835
  %v1837 = vlaneseq
  %v1838 = vshrl.u32 %v1837, 7
  %v1839 = vsub.s32 %v1836, %v1838
  %v1840 = vrot.slane %v1812, %v1839
  %v1841 = vcombine.low %v1819, %v1826
  %v1842 = vcombine.low %v1833, %v1840
  %v1844 = vunpack.c.l.s4 1966171168
  %v1845 = vunpack.c.0.s8 %v1844
  %v1846 = vlaneseq
  %v1847 = vshrl.u32 %v1846, 7
  %v1848 = vsub.s32 %v1845, %v1847
  %v1849 = vrot.slane %v1841, %v1848
  %v1851 = vunpack.c.l.s4 1966171168
  %v1852 = vunpack.c.0.s8 %v1851
  %v1853 = vlaneseq
  %v1854 = vshrl.u32 %v1853, 7
  %v1855 = vsub.s32 %v1852, %v1854
  %v1856 = vrot.slane %v1842, %v1855
  %v1857 = vcombine.low %v1849, %v1856
  %v1858 = vcombine.low %v1128, %v1132
  %v1859 = vcombine.low %v1136, %v1140
  %v1860 = vcombine.low %v1144, %v1148
  %v1861 = vcombine.low %v1152, %v1156
  %v1863 = vunpack.c.l.s4 1966171168
  %v1864 = vunpack.c.0.s8 %v1863
  %v1865 = vlaneseq
  %v1866 = vshrl.u32 %v1865, 7
  %v1867 = vsub.s32 %v1864, %v1866
  %v1868 = vrot.slane %v1858, %v1867
  %v1870 = vunpack.c.l.s4 1966171168
  %v1871 = vunpack.c.0.s8 %v1870
  %v1872 = vlaneseq
  %v1873 = vshrl.u32 %v1872, 7
  %v1874 = vsub.s32 %v1871, %v1873
  %v1875 = vrot.slane %v1859, %v1874
  %v1877 = vunpack.c.l.s4 1966171168
  %v1878 = vunpack.c.0.s8 %v1877
  %v1879 = vlaneseq
  %v1880 = vshrl.u32 %v1879, 7
  %v1881 = vsub.s32 %v1878, %v1880
  %v1882 = vrot.slane %v1860, %v1881
  %v1884 = vunpack.c.l.s4 1966171168
  %v1885 = vunpack.c.0.s8 %v1884
  %v1886 = vlaneseq
  %v1887 = vshrl.u32 %v1886, 7
  %v1888 = vsub.s32 %v1885, %v1887
  %v1889 = vrot.slane %v1861, %v1888
  %v1890 = vcombine.low %v1868, %v1875
  %v1891 = vcombine.low %v1882, %v1889
  %v1893 = vunpack.c.l.s4 1966171168
  %v1894 = vunpack.c.0.s8 %v1893
  %v1895 = vlaneseq
  %v1896 = vshrl.u32 %v1895, 7
  %v1897 = vsub.s32 %v1894, %v1896
  %v1898 = vrot.slane %v1890, %v1897
  %v1900 = vunpack.c.l.s4 1966171168
  %v1901 = vunpack.c.0.s8 %v1900
  %v1902 = vlaneseq
  %v1903 = vshrl.u32 %v1902, 7
  %v1904 = vsub.s32 %v1901, %v1903
  %v1905 = vrot.slane %v1891, %v1904
  %v1906 = vcombine.low %v1898, %v1905
  %v1907 = vcombine.low %v1160, %v1164
  %v1908 = vcombine.low %v1168, %v1172
  %v1909 = vcombine.low %v1176, %v1180
  %v1910 = vcombine.low %v1184, %v1188
  %v1912 = vunpack.c.l.s4 1966171168
  %v1913 = vunpack.c.0.s8 %v1912
  %v1914 = vlaneseq
  %v1915 = vshrl.u32 %v1914, 7
  %v1916 = vsub.s32 %v1913, %v1915
  %v1917 = vrot.slane %v1907, %v1916
  %v1919 = vunpack.c.l.s4 1966171168
  %v1920 = vunpack.c.0.s8 %v1919
  %v1921 = vlaneseq
  %v1922 = vshrl.u32 %v1921, 7
  %v1923 = vsub.s32 %v1920, %v1922
  %v1924 = vrot.slane %v1908, %v1923
  %v1926 = vunpack.c.l.s4 1966171168
  %v1927 = vunpack.c.0.s8 %v1926
  %v1928 = vlaneseq
  %v1929 = vshrl.u32 %v1928, 7
  %v1930 = vsub.s32 %v1927, %v1929
  %v1931 = vrot.slane %v1909, %v1930
  %v1933 = vunpack.c.l.s4 1966171168
  %v1934 = vunpack.c.0.s8 %v1933
  %v1935 = vlaneseq
  %v1936 = vshrl.u32 %v1935, 7
  %v1937 = vsub.s32 %v1934, %v1936
  %v1938 = vrot.slane %v1910, %v1937
  %v1939 = vcombine.low %v1917, %v1924
  %v1940 = vcombine.low %v1931, %v1938
  %v1942 = vunpack.c.l.s4 1966171168
  %v1943 = vunpack.c.0.s8 %v1942
  %v1944 = vlaneseq
  %v1945 = vshrl.u32 %v1944, 7
  %v1946 = vsub.s32 %v1943, %v1945
  %v1947 = vrot.slane %v1939, %v1946
  %v1949 = vunpack.c.l.s4 1966171168
  %v1950 = vunpack.c.0.s8 %v1949
  %v1951 = vlaneseq
  %v1952 = vshrl.u32 %v1951, 7
  %v1953 = vsub.s32 %v1950, %v1952
  %v1954 = vrot.slane %v1940, %v1953
  %v1955 = vcombine.low %v1947, %v1954
  %v1956 = vcombine.low %v1192, %v1196
  %v1957 = vcombine.low %v1200, %v1204
  %v1958 = vcombine.low %v1208, %v1212
  %v1959 = vcombine.low %v1216, %v1220
  %v1961 = vunpack.c.l.s4 1966171168
  %v1962 = vunpack.c.0.s8 %v1961
  %v1963 = vlaneseq
  %v1964 = vshrl.u32 %v1963, 7
  %v1965 = vsub.s32 %v1962, %v1964
  %v1966 = vrot.slane %v1956, %v1965
  %v1968 = vunpack.c.l.s4 1966171168
  %v1969 = vunpack.c.0.s8 %v1968
  %v1970 = vlaneseq
  %v1971 = vshrl.u32 %v1970, 7
  %v1972 = vsub.s32 %v1969, %v1971
  %v1973 = vrot.slane %v1957, %v1972
  %v1975 = vunpack.c.l.s4 1966171168
  %v1976 = vunpack.c.0.s8 %v1975
  %v1977 = vlaneseq
  %v1978 = vshrl.u32 %v1977, 7
  %v1979 = vsub.s32 %v1976, %v1978
  %v1980 = vrot.slane %v1958, %v1979
  %v1982 = vunpack.c.l.s4 1966171168
  %v1983 = vunpack.c.0.s8 %v1982
  %v1984 = vlaneseq
  %v1985 = vshrl.u32 %v1984, 7
  %v1986 = vsub.s32 %v1983, %v1985
  %v1987 = vrot.slane %v1959, %v1986
  %v1988 = vcombine.low %v1966, %v1973
  %v1989 = vcombine.low %v1980, %v1987
  %v1991 = vunpack.c.l.s4 1966171168
  %v1992 = vunpack.c.0.s8 %v1991
  %v1993 = vlaneseq
  %v1994 = vshrl.u32 %v1993, 7
  %v1995 = vsub.s32 %v1992, %v1994
  %v1996 = vrot.slane %v1988, %v1995
  %v1998 = vunpack.c.l.s4 1966171168
  %v1999 = vunpack.c.0.s8 %v1998
  %v2000 = vlaneseq
  %v2001 = vshrl.u32 %v2000, 7
  %v2002 = vsub.s32 %v1999, %v2001
  %v2003 = vrot.slane %v1989, %v2002
  %v2004 = vcombine.low %v1996, %v2003
  %2005 = vset.pattern.permute.xlu0 0
  %2006 = vperm.xlu0 %2005, %v1269
  %v2007 = vpop.permute.xlu0 %2006
  %2008 = vset.pattern.permute.xlu0 0
  %2009 = vperm.xlu0 %2008, %v1318
  %v2010 = vpop.permute.xlu0 %2009
  %2011 = vset.pattern.permute.xlu0 0
  %2012 = vperm.xlu0 %2011, %v1367
  %v2013 = vpop.permute.xlu0 %2012
  %2014 = vset.pattern.permute.xlu0 0
  %2015 = vperm.xlu0 %2014, %v1416
  %v2016 = vpop.permute.xlu0 %2015
  %2017 = vset.pattern.permute.xlu0 0
  %2018 = vperm.xlu0 %2017, %v1465
  %v2019 = vpop.permute.xlu0 %2018
  %2020 = vset.pattern.permute.xlu0 0
  %2021 = vperm.xlu0 %2020, %v1514
  %v2022 = vpop.permute.xlu0 %2021
  %2023 = vset.pattern.permute.xlu0 0
  %2024 = vperm.xlu0 %2023, %v1563
  %v2025 = vpop.permute.xlu0 %2024
  %2026 = vset.pattern.permute.xlu0 0
  %2027 = vperm.xlu0 %2026, %v1612
  %v2028 = vpop.permute.xlu0 %2027
  %2029 = vset.pattern.permute.xlu0 0
  %2030 = vperm.xlu0 %2029, %v1661
  %v2031 = vpop.permute.xlu0 %2030
  %2032 = vset.pattern.permute.xlu0 0
  %2033 = vperm.xlu0 %2032, %v1710
  %v2034 = vpop.permute.xlu0 %2033
  %2035 = vset.pattern.permute.xlu0 0
  %2036 = vperm.xlu0 %2035, %v1759
  %v2037 = vpop.permute.xlu0 %2036
  %2038 = vset.pattern.permute.xlu0 0
  %2039 = vperm.xlu0 %2038, %v1808
  %v2040 = vpop.permute.xlu0 %2039
  %2041 = vset.pattern.permute.xlu0 0
  %2042 = vperm.xlu0 %2041, %v1857
  %v2043 = vpop.permute.xlu0 %2042
  %2044 = vset.pattern.permute.xlu0 0
  %2045 = vperm.xlu0 %2044, %v1906
  %v2046 = vpop.permute.xlu0 %2045
  %2047 = vset.pattern.permute.xlu0 0
  %2048 = vperm.xlu0 %2047, %v1955
  %v2049 = vpop.permute.xlu0 %2048
  %2050 = vset.pattern.permute.xlu0 0
  %2051 = vperm.xlu0 %2050, %v2004
  %v2052 = vpop.permute.xlu0 %2051
  %v2053 = vlaneseq
  %v2054 = vshrl.u32 %v2053, 7
  %v2055 = vsub.s32 %v562, %v2054
  %v2056 = vrot.slane %v2007, %v2055
  %v2057 = vlaneseq
  %v2058 = vshrl.u32 %v2057, 7
  %v2059 = vsub.s32 %v567, %v2058
  %v2060 = vrot.slane %v2010, %v2059
  %v2061 = vsel %vm572, %v2060, %v2056
  %v2062 = vlaneseq
  %v2063 = vshrl.u32 %v2062, 7
  %v2064 = vsub.s32 %v574, %v2063
  %v2065 = vrot.slane %v2013, %v2064
  %v2066 = vsel %vm579, %v2065, %v2061
  %v2067 = vlaneseq
  %v2068 = vshrl.u32 %v2067, 7
  %v2069 = vsub.s32 %v581, %v2068
  %v2070 = vrot.slane %v2016, %v2069
  %v2071 = vsel %vm586, %v2070, %v2066
  %v2072 = vlaneseq
  %v2073 = vshrl.u32 %v2072, 7
  %v2074 = vsub.s32 %v588, %v2073
  %v2075 = vrot.slane %v2019, %v2074
  %v2076 = vsel %vm593, %v2075, %v2071
  %v2077 = vlaneseq
  %v2078 = vshrl.u32 %v2077, 7
  %v2079 = vsub.s32 %v595, %v2078
  %v2080 = vrot.slane %v2022, %v2079
  %v2081 = vsel %vm600, %v2080, %v2076
  %v2082 = vlaneseq
  %v2083 = vshrl.u32 %v2082, 7
  %v2084 = vsub.s32 %v602, %v2083
  %v2085 = vrot.slane %v2025, %v2084
  %v2086 = vsel %vm607, %v2085, %v2081
  %v2087 = vlaneseq
  %v2088 = vshrl.u32 %v2087, 7
  %v2089 = vsub.s32 %v609, %v2088
  %v2090 = vrot.slane %v2028, %v2089
  %v2091 = vsel %vm614, %v2090, %v2086
  %v2092 = vlaneseq
  %v2093 = vshrl.u32 %v2092, 7
  %v2094 = vsub.s32 %v616, %v2093
  %v2095 = vrot.slane %v2031, %v2094
  %v2096 = vsel %vm621, %v2095, %v2091
  %v2097 = vlaneseq
  %v2098 = vshrl.u32 %v2097, 7
  %v2099 = vsub.s32 %v623, %v2098
  %v2100 = vrot.slane %v2034, %v2099
  %v2101 = vsel %vm628, %v2100, %v2096
  %v2102 = vlaneseq
  %v2103 = vshrl.u32 %v2102, 7
  %v2104 = vsub.s32 %v630, %v2103
  %v2105 = vrot.slane %v2037, %v2104
  %v2106 = vsel %vm635, %v2105, %v2101
  %v2107 = vlaneseq
  %v2108 = vshrl.u32 %v2107, 7
  %v2109 = vsub.s32 %v637, %v2108
  %v2110 = vrot.slane %v2040, %v2109
  %v2111 = vsel %vm642, %v2110, %v2106
  %v2112 = vlaneseq
  %v2113 = vshrl.u32 %v2112, 7
  %v2114 = vsub.s32 %v644, %v2113
  %v2115 = vrot.slane %v2043, %v2114
  %v2116 = vsel %vm649, %v2115, %v2111
  %v2117 = vlaneseq
  %v2118 = vshrl.u32 %v2117, 7
  %v2119 = vsub.s32 %v651, %v2118
  %v2120 = vrot.slane %v2046, %v2119
  %v2121 = vsel %vm656, %v2120, %v2116
  %v2122 = vlaneseq
  %v2123 = vshrl.u32 %v2122, 7
  %v2124 = vsub.s32 %v658, %v2123
  %v2125 = vrot.slane %v2049, %v2124
  %v2126 = vsel %vm663, %v2125, %v2121
  %v2127 = vlaneseq
  %v2128 = vshrl.u32 %v2127, 7
  %v2129 = vsub.s32 %v665, %v2128
  %v2130 = vrot.slane %v2052, %v2129
  %v2131 = vsel %vm670, %v2130, %v2126
  %v2133 = vunpack.c.l.s4 1966171168
  %v2134 = vunpack.c.0.s8 %v2133
  %v2135 = vlaneseq
  %v2136 = vshrl.u32 %v2135, 7
  %v2137 = vsub.s32 %v2134, %v2136
  %v2138 = vrot.slane %v2131, %v2137
  %v2140 = vunpack.c.l.s4 1966171168
  %v2141 = vunpack.c.0.s8 %v2140
  %v2142 = vlaneseq
  %v2143 = vshrl.u32 %v2142, 7
  %v2144 = vsub.s32 %v2141, %v2143
  %v2145 = vrot.slane %v2138, %v2144
  %v2147 = vmul.f32 %v676, %v2145
  %2148 = vst [vmem:[%s9] sm:$0x1] %v2147
  // Predicated region
  $region34: #{sample_scores.1} parent=0 // pred_check
    _
  $region35: #{sample_scores.1} parent=0 // pred_check_branch
    %2150 = sbr.rel (0) target = $region37
  $region36: #{sample_scores.1} parent=0 // pred_region
    _
  $region37: #{sample_scores.1} parent=0 // pred_fallthru
    _
  // Predicated region
  $region38: #{sample_scores.1} parent=0 // pred_check
    _
  $region39: #{sample_scores.1} parent=0 // pred_check_branch
    %2152 = sbr.rel (0) target = $region41
  $region40: #{sample_scores.1} parent=0 // pred_region
    _
  $region41: #{sample_scores.1} parent=0 // pred_fallthru
    _
  // Predicated region
  $region42: #{sample_scores.1} parent=0 // pred_check
    _
  $region43: #{sample_scores.1} parent=0 // pred_check_branch
    %2154 = sbr.rel (0) target = $region45
  $region44: #{sample_scores.1} parent=0 // pred_region
    _
  $region45: #{sample_scores.1} parent=0 // pred_fallthru
    _
  // Predicated region
  $region46: #{sample_scores.1} parent=0 // pred_check
    _
  $region47: #{sample_scores.1} parent=0 // pred_check_branch
    %2156 = sbr.rel (0) target = $region49
  $region48: #{sample_scores.1} parent=0 // pred_region
    _
  $region49: #{sample_scores.1} parent=0 // pred_fallthru
    _

</llo_original>
